<compile_context>
chip_gen: v6e
topology: v6e:2x2x1
jax: 0.10.0
libtpu: 0.0.40
codegen_flags: <defaults>
</compile_context>

<pallas_src>
import functools

import jax
import jax.numpy as jnp
from jax.experimental import pallas as pl
from jax.experimental.pallas import tpu as pltpu

# Layer widths of SimpleDNN: input -> 64 -> 128 -> 256 -> 256 -> 128 -> 96
#                            -> 48 -> 24 -> 16 -> output
HIDDEN_DIMS = [64, 128, 256, 256, 128, 96, 48, 24, 16]

_LANE = 128      # lane width: last dim should be a multiple of this
_SUBLANE = 8     # sublane width: second-to-last dim multiple


def _round_up(n, m):
    return ((n + m - 1) // m) * m


def _mlp_kernel(x_ref, *refs):
    """Fused MLP forward for one batch tile.

    refs = (w1, b1, w2, b2, ..., w10, b10, o_ref)
    Weights are bf16, biases f32, all passed as full (grid-invariant) VMEM
    blocks padded to lane multiples of 128.
    Dropout (p=0.2) after fc3 is evaluated in inference mode -> identity.
    """
    o_ref = refs[-1]
    param_refs = refs[:-1]
    n_layers = len(param_refs) // 2

    h = x_ref[...]                                   # (bt, in_pad) float32
    for layer in range(n_layers):
        w = param_refs[2 * layer][...]               # (in_pad, out_pad) bf16
        b = param_refs[2 * layer + 1][...]           # (1, out_pad) f32
        # bf16 operands on the MXU, f32 accumulation.
        h = jnp.dot(h.astype(jnp.bfloat16), w,
                    preferred_element_type=jnp.float32) + b
        if layer != n_layers - 1:                    # final fc13 has no ReLU
            h = jnp.maximum(h, 0.0)                  # VPU slot (cheap filler)
        # TODO(synk): training-mode dropout_b (p=0.2) would use
        # pltpu.prng_seed + pltpu.prng_random_bits for the mask; eval mode is
        # the identity so nothing is emitted here.
    o_ref[...] = h.astype(o_ref.dtype)


@functools.partial(jax.jit, static_argnames=("batch_tile",))
def simple_dnn_forward(x, params, *, batch_tile=128):
    """Run the SimpleDNN forward pass via a Pallas kernel.

    x:      (B, input_dim) float32
    params: list of (W, b) with W: (in, out) f32, b: (1, out) f32
    """
    B, input_dim = x.shape
    output_dim = params[-1][0].shape[1]

    # ---- pad feature dims to multiples of 128 lanes, cast weights to bf16 ----
    in_pad0 = _round_up(input_dim, _LANE)
    packed = []
    prev_pad = in_pad0
    for w, b in params:
        d_in, d_out = w.shape
        d_out_pad = _round_up(d_out, _LANE)
        w_p = jnp.zeros((prev_pad, d_out_pad), jnp.bfloat16)
        w_p = w_p.at[:d_in, :d_out].set(w.astype(jnp.bfloat16))
        b_p = jnp.zeros((1, d_out_pad), jnp.float32)
        b_p = b_p.at[:, :d_out].set(b.reshape(1, -1).astype(jnp.float32))
        packed.append((w_p, b_p))
        prev_pad = d_out_pad
    out_pad = prev_pad

    # ---- pad the batch to a multiple of an MXU-friendly batch tile ----------
    bt = min(batch_tile, _round_up(B, _SUBLANE))
    B_pad = _round_up(B, bt)
    x_p = jnp.zeros((B_pad, in_pad0), jnp.float32)
    x_p = x_p.at[:B, :input_dim].set(x.astype(jnp.float32))

    # ---- specs --------------------------------------------------------------
    flat_params = []
    in_specs = [pl.BlockSpec((bt, in_pad0), lambda i: (i, 0))]
    for w_p, b_p in packed:
        flat_params.extend([w_p, b_p])
        # Constant block index -> Pallas keeps these blocks resident in VMEM
        # and does not re-DMA them across grid steps.
        in_specs.append(pl.BlockSpec(w_p.shape, lambda i: (0, 0)))
        in_specs.append(pl.BlockSpec(b_p.shape, lambda i: (0, 0)))

    out_specs = pl.BlockSpec((bt, out_pad), lambda i: (i, 0))

    flops = 2 * B_pad * sum(w.shape[0] * w.shape[1] for w, _ in packed)
    bytes_accessed = (
        x_p.size * 4
        + B_pad * out_pad * 4
        + sum(w.size * 2 + b.size * 4 for w, b in packed)
    )

    out_padded = pl.pallas_call(
        _mlp_kernel,
        out_shape=jax.ShapeDtypeStruct((B_pad, out_pad), jnp.float32),
        grid_spec=pltpu.PrefetchScalarGridSpec(
            num_scalar_prefetch=0,
            grid=(B_pad // bt,),
            in_specs=in_specs,
            out_specs=out_specs,
        ),
        compiler_params=pltpu.CompilerParams(
            dimension_semantics=("parallel",),
            # Budget consciously against v7x's smaller VMEM; this network is
            # ~1 MiB of bf16 params + small activation tiles, so 32 MiB is ample.
            vmem_limit_bytes=32 * 1024 * 1024,
        ),
        cost_estimate=pl.CostEstimate(
            flops=flops, transcendentals=0, bytes_accessed=bytes_accessed),
    )(x_p, *flat_params)

    return out_padded[:B, :output_dim]


def init_params(key, input_dim, output_dim):
    """Deterministic parameter init matching nn.Linear shapes (transposed)."""
    dims = [input_dim] + HIDDEN_DIMS + [output_dim]
    params = []
    for layer_idx in range(len(dims) - 1):
        d_in, d_out = dims[layer_idx], dims[layer_idx + 1]
        key, wk, bk = jax.random.split(key, 3)
        bound = 1.0 / jnp.sqrt(d_in)
        w = jax.random.uniform(wk, (d_in, d_out), jnp.float32, -bound, bound)
        b = jax.random.uniform(bk, (1, d_out), jnp.float32, -bound, bound)
        params.append((w, b))
    return params


def reference_forward(x, params):
    """Pure-JAX reference mirroring the kernel's bf16-operand / f32-accumulate
    numerics (eval-mode dropout == identity, no ReLU on the last layer)."""
    h = x.astype(jnp.float32)
    n = len(params)
    for i, (w, b) in enumerate(params):
        h_q = h.astype(jnp.bfloat16).astype(jnp.float32)
        w_q = w.astype(jnp.bfloat16).astype(jnp.float32)
        h = jnp.dot(h_q, w_q,
                    precision=jax.lax.Precision.HIGHEST) + b.reshape(1, -1)
        if i != n - 1:
            h = jnp.maximum(h, 0.0)
    return h


if __name__ == "__main__":
    key = jax.random.PRNGKey(0)
    batch, input_dim, output_dim = 16, 32, 8

    kx, kp = jax.random.split(key)
    x = jax.random.normal(kx, (batch, input_dim), jnp.float32)
    params = init_params(kp, input_dim, output_dim)

    out = simple_dnn_forward(x, params, batch_tile=128)
    out = jax.block_until_ready(out)

    ref = reference_forward(x, params)
    assert out.shape == (batch, output_dim)
    max_err = float(jnp.max(jnp.abs(out - ref)))
    assert jnp.allclose(out, ref, atol=2e-3, rtol=2e-3), (
        f"mismatch vs reference, max abs err = {max_err}")

    print("KERNEL_OK")
</pallas_src>

<mosaic_0001>
module attributes {stable_mosaic.version = 11 : i64} {
  func.func @_mlp_kernel(%arg0: i32, %arg1: memref<16x128xf32, #tpu.memory_space<vmem>>, %arg2: memref<128x128xbf16, #tpu.memory_space<vmem>>, %arg3: memref<1x128xf32, #tpu.memory_space<vmem>>, %arg4: memref<128x128xbf16, #tpu.memory_space<vmem>>, %arg5: memref<1x128xf32, #tpu.memory_space<vmem>>, %arg6: memref<128x256xbf16, #tpu.memory_space<vmem>>, %arg7: memref<1x256xf32, #tpu.memory_space<vmem>>, %arg8: memref<256x256xbf16, #tpu.memory_space<vmem>>, %arg9: memref<1x256xf32, #tpu.memory_space<vmem>>, %arg10: memref<256x128xbf16, #tpu.memory_space<vmem>>, %arg11: memref<1x128xf32, #tpu.memory_space<vmem>>, %arg12: memref<128x128xbf16, #tpu.memory_space<vmem>>, %arg13: memref<1x128xf32, #tpu.memory_space<vmem>>, %arg14: memref<128x128xbf16, #tpu.memory_space<vmem>>, %arg15: memref<1x128xf32, #tpu.memory_space<vmem>>, %arg16: memref<128x128xbf16, #tpu.memory_space<vmem>>, %arg17: memref<1x128xf32, #tpu.memory_space<vmem>>, %arg18: memref<128x128xbf16, #tpu.memory_space<vmem>>, %arg19: memref<1x128xf32, #tpu.memory_space<vmem>>, %arg20: memref<128x128xbf16, #tpu.memory_space<vmem>>, %arg21: memref<1x128xf32, #tpu.memory_space<vmem>>, %arg22: memref<16x128xf32, #tpu.memory_space<vmem>>) attributes {dimension_semantics = [#tpu.dimension_semantics<parallel>], iteration_bounds = array<i64: 1>, scalar_prefetch = 0 : i64, scratch_operands = 0 : i64, tpu.core_type = #tpu.core_type<tc>, window_params = [{transform_indices = @transform_0, window_bounds = array<i64: 16, 128>}, {pipeline_mode = #tpu.pipeline_mode<synchronous>, transform_indices = @transform_1, window_bounds = array<i64: 128, 128>}, {pipeline_mode = #tpu.pipeline_mode<synchronous>, transform_indices = @transform_2, window_bounds = array<i64: 1, 128>}, {pipeline_mode = #tpu.pipeline_mode<synchronous>, transform_indices = @transform_3, window_bounds = array<i64: 128, 128>}, {pipeline_mode = #tpu.pipeline_mode<synchronous>, transform_indices = @transform_4, window_bounds = array<i64: 1, 128>}, {pipeline_mode = #tpu.pipeline_mode<synchronous>, transform_indices = @transform_5, window_bounds = array<i64: 128, 256>}, {pipeline_mode = #tpu.pipeline_mode<synchronous>, transform_indices = @transform_6, window_bounds = array<i64: 1, 256>}, {pipeline_mode = #tpu.pipeline_mode<synchronous>, transform_indices = @transform_7, window_bounds = array<i64: 256, 256>}, {pipeline_mode = #tpu.pipeline_mode<synchronous>, transform_indices = @transform_8, window_bounds = array<i64: 1, 256>}, {pipeline_mode = #tpu.pipeline_mode<synchronous>, transform_indices = @transform_9, window_bounds = array<i64: 256, 128>}, {pipeline_mode = #tpu.pipeline_mode<synchronous>, transform_indices = @transform_10, window_bounds = array<i64: 1, 128>}, {pipeline_mode = #tpu.pipeline_mode<synchronous>, transform_indices = @transform_11, window_bounds = array<i64: 128, 128>}, {pipeline_mode = #tpu.pipeline_mode<synchronous>, transform_indices = @transform_12, window_bounds = array<i64: 1, 128>}, {pipeline_mode = #tpu.pipeline_mode<synchronous>, transform_indices = @transform_13, window_bounds = array<i64: 128, 128>}, {pipeline_mode = #tpu.pipeline_mode<synchronous>, transform_indices = @transform_14, window_bounds = array<i64: 1, 128>}, {pipeline_mode = #tpu.pipeline_mode<synchronous>, transform_indices = @transform_15, window_bounds = array<i64: 128, 128>}, {pipeline_mode = #tpu.pipeline_mode<synchronous>, transform_indices = @transform_16, window_bounds = array<i64: 1, 128>}, {pipeline_mode = #tpu.pipeline_mode<synchronous>, transform_indices = @transform_17, window_bounds = array<i64: 128, 128>}, {pipeline_mode = #tpu.pipeline_mode<synchronous>, transform_indices = @transform_18, window_bounds = array<i64: 1, 128>}, {pipeline_mode = #tpu.pipeline_mode<synchronous>, transform_indices = @transform_19, window_bounds = array<i64: 128, 128>}, {pipeline_mode = #tpu.pipeline_mode<synchronous>, transform_indices = @transform_20, window_bounds = array<i64: 1, 128>}, {transform_indices = @transform_21, window_bounds = array<i64: 16, 128>}]} {
    %c0 = arith.constant 0 : index
    %c0_0 = arith.constant 0 : index
    %0 = vector.load %arg1[%c0, %c0_0] : memref<16x128xf32, #tpu.memory_space<vmem>>, vector<16x128xf32>
    %c0_1 = arith.constant 0 : index
    %c0_2 = arith.constant 0 : index
    %1 = vector.load %arg2[%c0_1, %c0_2] : memref<128x128xbf16, #tpu.memory_space<vmem>>, vector<128x128xbf16>
    %c0_3 = arith.constant 0 : index
    %c0_4 = arith.constant 0 : index
    %2 = vector.load %arg3[%c0_3, %c0_4] : memref<1x128xf32, #tpu.memory_space<vmem>>, vector<1x128xf32>
    %3 = arith.truncf %0 : vector<16x128xf32> to vector<16x128xbf16>
    %cst = arith.constant dense<0.000000e+00> : vector<16x128xf32>
    %4 = tpu.matmul %3, %1, %cst {dimension_numbers = #tpu.dot_dimension_numbers<[1], [0], [0], [1], [0, 0, 1, 1], [], []>} : vector<16x128xbf16>, vector<128x128xbf16>, vector<16x128xf32> -> vector<16x128xf32>
    %5 = vector.broadcast %2 : vector<1x128xf32> to vector<16x128xf32>
    %6 = arith.addf %4, %5 : vector<16x128xf32>
    %cst_5 = arith.constant 0.000000e+00 : f32
    %7 = vector.broadcast %cst_5 : f32 to vector<16x128xf32>
    %8 = arith.maximumf %6, %7 : vector<16x128xf32>
    %c0_6 = arith.constant 0 : index
    %c0_7 = arith.constant 0 : index
    %9 = vector.load %arg4[%c0_6, %c0_7] : memref<128x128xbf16, #tpu.memory_space<vmem>>, vector<128x128xbf16>
    %c0_8 = arith.constant 0 : index
    %c0_9 = arith.constant 0 : index
    %10 = vector.load %arg5[%c0_8, %c0_9] : memref<1x128xf32, #tpu.memory_space<vmem>>, vector<1x128xf32>
    %11 = arith.truncf %8 : vector<16x128xf32> to vector<16x128xbf16>
    %cst_10 = arith.constant dense<0.000000e+00> : vector<16x128xf32>
    %12 = tpu.matmul %11, %9, %cst_10 {dimension_numbers = #tpu.dot_dimension_numbers<[1], [0], [0], [1], [0, 0, 1, 1], [], []>} : vector<16x128xbf16>, vector<128x128xbf16>, vector<16x128xf32> -> vector<16x128xf32>
    %13 = vector.broadcast %10 : vector<1x128xf32> to vector<16x128xf32>
    %14 = arith.addf %12, %13 : vector<16x128xf32>
    %cst_11 = arith.constant 0.000000e+00 : f32
    %15 = vector.broadcast %cst_11 : f32 to vector<16x128xf32>
    %16 = arith.maximumf %14, %15 : vector<16x128xf32>
    %c0_12 = arith.constant 0 : index
    %c0_13 = arith.constant 0 : index
    %17 = vector.load %arg6[%c0_12, %c0_13] : memref<128x256xbf16, #tpu.memory_space<vmem>>, vector<128x256xbf16>
    %c0_14 = arith.constant 0 : index
    %c0_15 = arith.constant 0 : index
    %18 = vector.load %arg7[%c0_14, %c0_15] : memref<1x256xf32, #tpu.memory_space<vmem>>, vector<1x256xf32>
    %19 = arith.truncf %16 : vector<16x128xf32> to vector<16x128xbf16>
    %cst_16 = arith.constant dense<0.000000e+00> : vector<16x256xf32>
    %20 = tpu.matmul %19, %17, %cst_16 {dimension_numbers = #tpu.dot_dimension_numbers<[1], [0], [0], [1], [0, 0, 1, 1], [], []>} : vector<16x128xbf16>, vector<128x256xbf16>, vector<16x256xf32> -> vector<16x256xf32>
    %21 = vector.broadcast %18 : vector<1x256xf32> to vector<16x256xf32>
    %22 = arith.addf %20, %21 : vector<16x256xf32>
    %cst_17 = arith.constant 0.000000e+00 : f32
    %23 = vector.broadcast %cst_17 : f32 to vector<16x256xf32>
    %24 = arith.maximumf %22, %23 : vector<16x256xf32>
    %c0_18 = arith.constant 0 : index
    %c0_19 = arith.constant 0 : index
    %25 = vector.load %arg8[%c0_18, %c0_19] : memref<256x256xbf16, #tpu.memory_space<vmem>>, vector<256x256xbf16>
    %c0_20 = arith.constant 0 : index
    %c0_21 = arith.constant 0 : index
    %26 = vector.load %arg9[%c0_20, %c0_21] : memref<1x256xf32, #tpu.memory_space<vmem>>, vector<1x256xf32>
    %27 = arith.truncf %24 : vector<16x256xf32> to vector<16x256xbf16>
    %cst_22 = arith.constant dense<0.000000e+00> : vector<16x256xf32>
    %28 = tpu.matmul %27, %25, %cst_22 {dimension_numbers = #tpu.dot_dimension_numbers<[1], [0], [0], [1], [0, 0, 1, 1], [], []>} : vector<16x256xbf16>, vector<256x256xbf16>, vector<16x256xf32> -> vector<16x256xf32>
    %29 = vector.broadcast %26 : vector<1x256xf32> to vector<16x256xf32>
    %30 = arith.addf %28, %29 : vector<16x256xf32>
    %cst_23 = arith.constant 0.000000e+00 : f32
    %31 = vector.broadcast %cst_23 : f32 to vector<16x256xf32>
    %32 = arith.maximumf %30, %31 : vector<16x256xf32>
    %c0_24 = arith.constant 0 : index
    %c0_25 = arith.constant 0 : index
    %33 = vector.load %arg10[%c0_24, %c0_25] : memref<256x128xbf16, #tpu.memory_space<vmem>>, vector<256x128xbf16>
    %c0_26 = arith.constant 0 : index
    %c0_27 = arith.constant 0 : index
    %34 = vector.load %arg11[%c0_26, %c0_27] : memref<1x128xf32, #tpu.memory_space<vmem>>, vector<1x128xf32>
    %35 = arith.truncf %32 : vector<16x256xf32> to vector<16x256xbf16>
    %cst_28 = arith.constant dense<0.000000e+00> : vector<16x128xf32>
    %36 = tpu.matmul %35, %33, %cst_28 {dimension_numbers = #tpu.dot_dimension_numbers<[1], [0], [0], [1], [0, 0, 1, 1], [], []>} : vector<16x256xbf16>, vector<256x128xbf16>, vector<16x128xf32> -> vector<16x128xf32>
    %37 = vector.broadcast %34 : vector<1x128xf32> to vector<16x128xf32>
    %38 = arith.addf %36, %37 : vector<16x128xf32>
    %cst_29 = arith.constant 0.000000e+00 : f32
    %39 = vector.broadcast %cst_29 : f32 to vector<16x128xf32>
    %40 = arith.maximumf %38, %39 : vector<16x128xf32>
    %c0_30 = arith.constant 0 : index
    %c0_31 = arith.constant 0 : index
    %41 = vector.load %arg12[%c0_30, %c0_31] : memref<128x128xbf16, #tpu.memory_space<vmem>>, vector<128x128xbf16>
    %c0_32 = arith.constant 0 : index
    %c0_33 = arith.constant 0 : index
    %42 = vector.load %arg13[%c0_32, %c0_33] : memref<1x128xf32, #tpu.memory_space<vmem>>, vector<1x128xf32>
    %43 = arith.truncf %40 : vector<16x128xf32> to vector<16x128xbf16>
    %cst_34 = arith.constant dense<0.000000e+00> : vector<16x128xf32>
    %44 = tpu.matmul %43, %41, %cst_34 {dimension_numbers = #tpu.dot_dimension_numbers<[1], [0], [0], [1], [0, 0, 1, 1], [], []>} : vector<16x128xbf16>, vector<128x128xbf16>, vector<16x128xf32> -> vector<16x128xf32>
    %45 = vector.broadcast %42 : vector<1x128xf32> to vector<16x128xf32>
    %46 = arith.addf %44, %45 : vector<16x128xf32>
    %cst_35 = arith.constant 0.000000e+00 : f32
    %47 = vector.broadcast %cst_35 : f32 to vector<16x128xf32>
    %48 = arith.maximumf %46, %47 : vector<16x128xf32>
    %c0_36 = arith.constant 0 : index
    %c0_37 = arith.constant 0 : index
    %49 = vector.load %arg14[%c0_36, %c0_37] : memref<128x128xbf16, #tpu.memory_space<vmem>>, vector<128x128xbf16>
    %c0_38 = arith.constant 0 : index
    %c0_39 = arith.constant 0 : index
    %50 = vector.load %arg15[%c0_38, %c0_39] : memref<1x128xf32, #tpu.memory_space<vmem>>, vector<1x128xf32>
    %51 = arith.truncf %48 : vector<16x128xf32> to vector<16x128xbf16>
    %cst_40 = arith.constant dense<0.000000e+00> : vector<16x128xf32>
    %52 = tpu.matmul %51, %49, %cst_40 {dimension_numbers = #tpu.dot_dimension_numbers<[1], [0], [0], [1], [0, 0, 1, 1], [], []>} : vector<16x128xbf16>, vector<128x128xbf16>, vector<16x128xf32> -> vector<16x128xf32>
    %53 = vector.broadcast %50 : vector<1x128xf32> to vector<16x128xf32>
    %54 = arith.addf %52, %53 : vector<16x128xf32>
    %cst_41 = arith.constant 0.000000e+00 : f32
    %55 = vector.broadcast %cst_41 : f32 to vector<16x128xf32>
    %56 = arith.maximumf %54, %55 : vector<16x128xf32>
    %c0_42 = arith.constant 0 : index
    %c0_43 = arith.constant 0 : index
    %57 = vector.load %arg16[%c0_42, %c0_43] : memref<128x128xbf16, #tpu.memory_space<vmem>>, vector<128x128xbf16>
    %c0_44 = arith.constant 0 : index
    %c0_45 = arith.constant 0 : index
    %58 = vector.load %arg17[%c0_44, %c0_45] : memref<1x128xf32, #tpu.memory_space<vmem>>, vector<1x128xf32>
    %59 = arith.truncf %56 : vector<16x128xf32> to vector<16x128xbf16>
    %cst_46 = arith.constant dense<0.000000e+00> : vector<16x128xf32>
    %60 = tpu.matmul %59, %57, %cst_46 {dimension_numbers = #tpu.dot_dimension_numbers<[1], [0], [0], [1], [0, 0, 1, 1], [], []>} : vector<16x128xbf16>, vector<128x128xbf16>, vector<16x128xf32> -> vector<16x128xf32>
    %61 = vector.broadcast %58 : vector<1x128xf32> to vector<16x128xf32>
    %62 = arith.addf %60, %61 : vector<16x128xf32>
    %cst_47 = arith.constant 0.000000e+00 : f32
    %63 = vector.broadcast %cst_47 : f32 to vector<16x128xf32>
    %64 = arith.maximumf %62, %63 : vector<16x128xf32>
    %c0_48 = arith.constant 0 : index
    %c0_49 = arith.constant 0 : index
    %65 = vector.load %arg18[%c0_48, %c0_49] : memref<128x128xbf16, #tpu.memory_space<vmem>>, vector<128x128xbf16>
    %c0_50 = arith.constant 0 : index
    %c0_51 = arith.constant 0 : index
    %66 = vector.load %arg19[%c0_50, %c0_51] : memref<1x128xf32, #tpu.memory_space<vmem>>, vector<1x128xf32>
    %67 = arith.truncf %64 : vector<16x128xf32> to vector<16x128xbf16>
    %cst_52 = arith.constant dense<0.000000e+00> : vector<16x128xf32>
    %68 = tpu.matmul %67, %65, %cst_52 {dimension_numbers = #tpu.dot_dimension_numbers<[1], [0], [0], [1], [0, 0, 1, 1], [], []>} : vector<16x128xbf16>, vector<128x128xbf16>, vector<16x128xf32> -> vector<16x128xf32>
    %69 = vector.broadcast %66 : vector<1x128xf32> to vector<16x128xf32>
    %70 = arith.addf %68, %69 : vector<16x128xf32>
    %cst_53 = arith.constant 0.000000e+00 : f32
    %71 = vector.broadcast %cst_53 : f32 to vector<16x128xf32>
    %72 = arith.maximumf %70, %71 : vector<16x128xf32>
    %c0_54 = arith.constant 0 : index
    %c0_55 = arith.constant 0 : index
    %73 = vector.load %arg20[%c0_54, %c0_55] : memref<128x128xbf16, #tpu.memory_space<vmem>>, vector<128x128xbf16>
    %c0_56 = arith.constant 0 : index
    %c0_57 = arith.constant 0 : index
    %74 = vector.load %arg21[%c0_56, %c0_57] : memref<1x128xf32, #tpu.memory_space<vmem>>, vector<1x128xf32>
    %75 = arith.truncf %72 : vector<16x128xf32> to vector<16x128xbf16>
    %cst_58 = arith.constant dense<0.000000e+00> : vector<16x128xf32>
    %76 = tpu.matmul %75, %73, %cst_58 {dimension_numbers = #tpu.dot_dimension_numbers<[1], [0], [0], [1], [0, 0, 1, 1], [], []>} : vector<16x128xbf16>, vector<128x128xbf16>, vector<16x128xf32> -> vector<16x128xf32>
    %77 = vector.broadcast %74 : vector<1x128xf32> to vector<16x128xf32>
    %78 = arith.addf %76, %77 : vector<16x128xf32>
    %c0_59 = arith.constant 0 : index
    %c0_60 = arith.constant 0 : index
    %79 = vector.load %arg22[%c0_59, %c0_60] : memref<16x128xf32, #tpu.memory_space<vmem>>, vector<16x128xf32>
    tpu.vector_store %arg22[%c0_59, %c0_60], %78 {strides = array<i32>} : memref<16x128xf32, #tpu.memory_space<vmem>>, vector<16x128xf32>,
    return
  }
  func.func @transform_0(%arg0: i32) -> (i32, i32) {
    %c0_i32 = arith.constant 0 : i32
    %c0_i32_0 = arith.constant 0 : i32
    return %arg0, %c0_i32 : i32, i32
  }
  func.func @transform_1(%arg0: i32) -> (i32, i32) {
    %c0_i32 = arith.constant 0 : i32
    %c0_i32_0 = arith.constant 0 : i32
    %c0_i32_1 = arith.constant 0 : i32
    return %c0_i32, %c0_i32_0 : i32, i32
  }
  func.func @transform_2(%arg0: i32) -> (i32, i32) {
    %c0_i32 = arith.constant 0 : i32
    %c0_i32_0 = arith.constant 0 : i32
    %c0_i32_1 = arith.constant 0 : i32
    return %c0_i32, %c0_i32_0 : i32, i32
  }
  func.func @transform_3(%arg0: i32) -> (i32, i32) {
    %c0_i32 = arith.constant 0 : i32
    %c0_i32_0 = arith.constant 0 : i32
    %c0_i32_1 = arith.constant 0 : i32
    return %c0_i32, %c0_i32_0 : i32, i32
  }
  func.func @transform_4(%arg0: i32) -> (i32, i32) {
    %c0_i32 = arith.constant 0 : i32
    %c0_i32_0 = arith.constant 0 : i32
    %c0_i32_1 = arith.constant 0 : i32
    return %c0_i32, %c0_i32_0 : i32, i32
  }
  func.func @transform_5(%arg0: i32) -> (i32, i32) {
    %c0_i32 = arith.constant 0 : i32
    %c0_i32_0 = arith.constant 0 : i32
    %c0_i32_1 = arith.constant 0 : i32
    return %c0_i32, %c0_i32_0 : i32, i32
  }
  func.func @transform_6(%arg0: i32) -> (i32, i32) {
    %c0_i32 = arith.constant 0 : i32
    %c0_i32_0 = arith.constant 0 : i32
    %c0_i32_1 = arith.constant 0 : i32
    return %c0_i32, %c0_i32_0 : i32, i32
  }
  func.func @transform_7(%arg0: i32) -> (i32, i32) {
    %c0_i32 = arith.constant 0 : i32
    %c0_i32_0 = arith.constant 0 : i32
    %c0_i32_1 = arith.constant 0 : i32
    return %c0_i32, %c0_i32_0 : i32, i32
  }
  func.func @transform_8(%arg0: i32) -> (i32, i32) {
    %c0_i32 = arith.constant 0 : i32
    %c0_i32_0 = arith.constant 0 : i32
    %c0_i32_1 = arith.constant 0 : i32
    return %c0_i32, %c0_i32_0 : i32, i32
  }
  func.func @transform_9(%arg0: i32) -> (i32, i32) {
    %c0_i32 = arith.constant 0 : i32
    %c0_i32_0 = arith.constant 0 : i32
    %c0_i32_1 = arith.constant 0 : i32
    return %c0_i32, %c0_i32_0 : i32, i32
  }
  func.func @transform_10(%arg0: i32) -> (i32, i32) {
    %c0_i32 = arith.constant 0 : i32
    %c0_i32_0 = arith.constant 0 : i32
    %c0_i32_1 = arith.constant 0 : i32
    return %c0_i32, %c0_i32_0 : i32, i32
  }
  func.func @transform_11(%arg0: i32) -> (i32, i32) {
    %c0_i32 = arith.constant 0 : i32
    %c0_i32_0 = arith.constant 0 : i32
    %c0_i32_1 = arith.constant 0 : i32
    return %c0_i32, %c0_i32_0 : i32, i32
  }
  func.func @transform_12(%arg0: i32) -> (i32, i32) {
    %c0_i32 = arith.constant 0 : i32
    %c0_i32_0 = arith.constant 0 : i32
    %c0_i32_1 = arith.constant 0 : i32
    return %c0_i32, %c0_i32_0 : i32, i32
  }
  func.func @transform_13(%arg0: i32) -> (i32, i32) {
    %c0_i32 = arith.constant 0 : i32
    %c0_i32_0 = arith.constant 0 : i32
    %c0_i32_1 = arith.constant 0 : i32
    return %c0_i32, %c0_i32_0 : i32, i32
  }
  func.func @transform_14(%arg0: i32) -> (i32, i32) {
    %c0_i32 = arith.constant 0 : i32
    %c0_i32_0 = arith.constant 0 : i32
    %c0_i32_1 = arith.constant 0 : i32
    return %c0_i32, %c0_i32_0 : i32, i32
  }
  func.func @transform_15(%arg0: i32) -> (i32, i32) {
    %c0_i32 = arith.constant 0 : i32
    %c0_i32_0 = arith.constant 0 : i32
    %c0_i32_1 = arith.constant 0 : i32
    return %c0_i32, %c0_i32_0 : i32, i32
  }
  func.func @transform_16(%arg0: i32) -> (i32, i32) {
    %c0_i32 = arith.constant 0 : i32
    %c0_i32_0 = arith.constant 0 : i32
    %c0_i32_1 = arith.constant 0 : i32
    return %c0_i32, %c0_i32_0 : i32, i32
  }
  func.func @transform_17(%arg0: i32) -> (i32, i32) {
    %c0_i32 = arith.constant 0 : i32
    %c0_i32_0 = arith.constant 0 : i32
    %c0_i32_1 = arith.constant 0 : i32
    return %c0_i32, %c0_i32_0 : i32, i32
  }
  func.func @transform_18(%arg0: i32) -> (i32, i32) {
    %c0_i32 = arith.constant 0 : i32
    %c0_i32_0 = arith.constant 0 : i32
    %c0_i32_1 = arith.constant 0 : i32
    return %c0_i32, %c0_i32_0 : i32, i32
  }
  func.func @transform_19(%arg0: i32) -> (i32, i32) {
    %c0_i32 = arith.constant 0 : i32
    %c0_i32_0 = arith.constant 0 : i32
    %c0_i32_1 = arith.constant 0 : i32
    return %c0_i32, %c0_i32_0 : i32, i32
  }
  func.func @transform_20(%arg0: i32) -> (i32, i32) {
    %c0_i32 = arith.constant 0 : i32
    %c0_i32_0 = arith.constant 0 : i32
    %c0_i32_1 = arith.constant 0 : i32
    return %c0_i32, %c0_i32_0 : i32, i32
  }
  func.func @transform_21(%arg0: i32) -> (i32, i32) {
    %c0_i32 = arith.constant 0 : i32
    %c0_i32_0 = arith.constant 0 : i32
    return %arg0, %c0_i32 : i32, i32
  }
}

</mosaic_0001>

<llo_original>
// kernel: simple_dnn_forward.1
$region0: #{simple_dnn_forward.1}
  #allocation0 [shape = 'u32[]', space=smem, size = 0x4, offset = 0x4, fixed_abs, tag = 'smem constant byte address 0x4 - core index']
  #allocation1 [shape = 'u32[144,128]{1,0:T(1,128)}', space=vmem, size = 0x12000, scoped, tag = 'internal scratch']
  %s0 = inlined_call_operand.vmem [shape: f32[16,128], index: 0, kind: input, shape index: {}]
  %s1 = inlined_call_operand.vmem [shape: bf16[128,128], index: 1, kind: input, shape index: {}]
  %s2 = inlined_call_operand.vmem [shape: f32[1,128], index: 2, kind: input, shape index: {}]
  %s3 = inlined_call_operand.vmem [shape: bf16[128,128], index: 3, kind: input, shape index: {}]
  %s4 = inlined_call_operand.vmem [shape: f32[1,128], index: 4, kind: input, shape index: {}]
  %s5 = inlined_call_operand.vmem [shape: bf16[128,256], index: 5, kind: input, shape index: {}]
  %s6 = inlined_call_operand.vmem [shape: f32[1,256], index: 6, kind: input, shape index: {}]
  %s7 = inlined_call_operand.vmem [shape: bf16[256,256], index: 7, kind: input, shape index: {}]
  %s8 = inlined_call_operand.vmem [shape: f32[1,256], index: 8, kind: input, shape index: {}]
  %s9 = inlined_call_operand.vmem [shape: bf16[256,128], index: 9, kind: input, shape index: {}]
  %s10 = inlined_call_operand.vmem [shape: f32[1,128], index: 10, kind: input, shape index: {}]
  %s11 = inlined_call_operand.vmem [shape: bf16[128,128], index: 11, kind: input, shape index: {}]
  %s12 = inlined_call_operand.vmem [shape: f32[1,128], index: 12, kind: input, shape index: {}]
  %s13 = inlined_call_operand.vmem [shape: bf16[128,128], index: 13, kind: input, shape index: {}]
  %s14 = inlined_call_operand.vmem [shape: f32[1,128], index: 14, kind: input, shape index: {}]
  %s15 = inlined_call_operand.vmem [shape: bf16[128,128], index: 15, kind: input, shape index: {}]
  %s16 = inlined_call_operand.vmem [shape: f32[1,128], index: 16, kind: input, shape index: {}]
  %s17 = inlined_call_operand.vmem [shape: bf16[128,128], index: 17, kind: input, shape index: {}]
  %s18 = inlined_call_operand.vmem [shape: f32[1,128], index: 18, kind: input, shape index: {}]
  %s19 = inlined_call_operand.vmem [shape: bf16[128,128], index: 19, kind: input, shape index: {}]
  %s20 = inlined_call_operand.vmem [shape: f32[1,128], index: 20, kind: input, shape index: {}]
  %s21 = inlined_call_operand.vmem [shape: f32[16,128], index: 21, kind: output, shape index: {}]
  %s22 = sld [smem:[#allocation0]]
  $region94: #{simple_dnn_forward.1} parent=0
    _
  %s24 = ssub.s32 1, %s22
  %s25 = scalar_select 0, %s24, %s22
  // Predicated region
  $region2: #{simple_dnn_forward.1} parent=0 // pred_check
    _
  $region3: #{simple_dnn_forward.1} parent=0 // pred_check_branch
    %27 = sbr.rel (0) target = $region5
  $region4: #{simple_dnn_forward.1} parent=0 // pred_region
    _
  $region5: #{simple_dnn_forward.1} parent=0 // pred_fallthru
    _
  // Predicated region
  $region6: #{simple_dnn_forward.1} parent=0 // pred_check
    _
  $region7: #{simple_dnn_forward.1} parent=0 // pred_check_branch
    %29 = sbr.rel (0) target = $region9
  $region8: #{simple_dnn_forward.1} parent=0 // pred_region
    _
  $region9: #{simple_dnn_forward.1} parent=0 // pred_fallthru
    _
  // Predicated region
  $region10: #{simple_dnn_forward.1} parent=0 // pred_check
    _
  $region11: #{simple_dnn_forward.1} parent=0 // pred_check_branch
    %31 = sbr.rel (0) target = $region13
  $region12: #{simple_dnn_forward.1} parent=0 // pred_region
    _
  $region13: #{simple_dnn_forward.1} parent=0 // pred_fallthru
    _
  // Predicated region
  $region14: #{simple_dnn_forward.1} parent=0 // pred_check
    _
  $region15: #{simple_dnn_forward.1} parent=0 // pred_check_branch
    %33 = sbr.rel (0) target = $region17
  $region16: #{simple_dnn_forward.1} parent=0 // pred_region
    _
  $region17: #{simple_dnn_forward.1} parent=0 // pred_fallthru
    _
  // Predicated region
  $region18: #{simple_dnn_forward.1} parent=0 // pred_check
    _
  $region19: #{simple_dnn_forward.1} parent=0 // pred_check_branch
    %35 = sbr.rel (0) target = $region21
  $region20: #{simple_dnn_forward.1} parent=0 // pred_region
    _
  $region21: #{simple_dnn_forward.1} parent=0 // pred_fallthru
    _
  // Predicated region
  $region22: #{simple_dnn_forward.1} parent=0 // pred_check
    _
  $region23: #{simple_dnn_forward.1} parent=0 // pred_check_branch
    %37 = sbr.rel (0) target = $region25
  $region24: #{simple_dnn_forward.1} parent=0 // pred_region
    _
  $region25: #{simple_dnn_forward.1} parent=0 // pred_fallthru
    _
  // Predicated region
  $region26: #{simple_dnn_forward.1} parent=0 // pred_check
    _
  $region27: #{simple_dnn_forward.1} parent=0 // pred_check_branch
    %39 = sbr.rel (0) target = $region29
  $region28: #{simple_dnn_forward.1} parent=0 // pred_region
    _
  $region29: #{simple_dnn_forward.1} parent=0 // pred_fallthru
    _
  // Predicated region
  $region30: #{simple_dnn_forward.1} parent=0 // pred_check
    _
  $region31: #{simple_dnn_forward.1} parent=0 // pred_check_branch
    %41 = sbr.rel (0) target = $region33
  $region32: #{simple_dnn_forward.1} parent=0 // pred_region
    _
  $region33: #{simple_dnn_forward.1} parent=0 // pred_fallthru
    _
  // Predicated region
  $region34: #{simple_dnn_forward.1} parent=0 // pred_check
    _
  $region35: #{simple_dnn_forward.1} parent=0 // pred_check_branch
    %43 = sbr.rel (0) target = $region37
  $region36: #{simple_dnn_forward.1} parent=0 // pred_region
    _
  $region37: #{simple_dnn_forward.1} parent=0 // pred_fallthru
    _
  // Predicated region
  $region38: #{simple_dnn_forward.1} parent=0 // pred_check
    _
  $region39: #{simple_dnn_forward.1} parent=0 // pred_check_branch
    %45 = sbr.rel (0) target = $region41
  $region40: #{simple_dnn_forward.1} parent=0 // pred_region
    _
  $region41: #{simple_dnn_forward.1} parent=0 // pred_fallthru
    _
  // Predicated region
  $region42: #{simple_dnn_forward.1} parent=0 // pred_check
    _
  $region43: #{simple_dnn_forward.1} parent=0 // pred_check_branch
    %47 = sbr.rel (0) target = $region45
  $region44: #{simple_dnn_forward.1} parent=0 // pred_region
    _
  $region45: #{simple_dnn_forward.1} parent=0 // pred_fallthru
    _
  // Predicated region
  $region46: #{simple_dnn_forward.1} parent=0 // pred_check
    _
  $region47: #{simple_dnn_forward.1} parent=0 // pred_check_branch
    %49 = sbr.rel (0) target = $region49
  $region48: #{simple_dnn_forward.1} parent=0 // pred_region
    _
  $region49: #{simple_dnn_forward.1} parent=0 // pred_fallthru
    _
  // Predicated region
  $region50: #{simple_dnn_forward.1} parent=0 // pred_check
    _
  $region51: #{simple_dnn_forward.1} parent=0 // pred_check_branch
    %51 = sbr.rel (0) target = $region53
  $region52: #{simple_dnn_forward.1} parent=0 // pred_region
    _
  $region53: #{simple_dnn_forward.1} parent=0 // pred_fallthru
    _
  // Predicated region
  $region54: #{simple_dnn_forward.1} parent=0 // pred_check
    _
  $region55: #{simple_dnn_forward.1} parent=0 // pred_check_branch
    %53 = sbr.rel (0) target = $region57
  $region56: #{simple_dnn_forward.1} parent=0 // pred_region
    _
  $region57: #{simple_dnn_forward.1} parent=0 // pred_fallthru
    _
  // Predicated region
  $region58: #{simple_dnn_forward.1} parent=0 // pred_check
    _
  $region59: #{simple_dnn_forward.1} parent=0 // pred_check_branch
    %55 = sbr.rel (0) target = $region61
  $region60: #{simple_dnn_forward.1} parent=0 // pred_region
    _
  $region61: #{simple_dnn_forward.1} parent=0 // pred_fallthru
    _
  // Predicated region
  $region62: #{simple_dnn_forward.1} parent=0 // pred_check
    _
  $region63: #{simple_dnn_forward.1} parent=0 // pred_check_branch
    %57 = sbr.rel (0) target = $region65
  $region64: #{simple_dnn_forward.1} parent=0 // pred_region
    _
  $region65: #{simple_dnn_forward.1} parent=0 // pred_fallthru
    _
  // Predicated region
  $region66: #{simple_dnn_forward.1} parent=0 // pred_check
    _
  $region67: #{simple_dnn_forward.1} parent=0 // pred_check_branch
    %59 = sbr.rel (0) target = $region69
  $region68: #{simple_dnn_forward.1} parent=0 // pred_region
    _
  $region69: #{simple_dnn_forward.1} parent=0 // pred_fallthru
    _
  // Predicated region
  $region70: #{simple_dnn_forward.1} parent=0 // pred_check
    _
  $region71: #{simple_dnn_forward.1} parent=0 // pred_check_branch
    %61 = sbr.rel (0) target = $region73
  $region72: #{simple_dnn_forward.1} parent=0 // pred_region
    _
  $region73: #{simple_dnn_forward.1} parent=0 // pred_fallthru
    _
  // Predicated region
  $region74: #{simple_dnn_forward.1} parent=0 // pred_check
    _
  $region75: #{simple_dnn_forward.1} parent=0 // pred_check_branch
    %63 = sbr.rel (0) target = $region77
  $region76: #{simple_dnn_forward.1} parent=0 // pred_region
    _
  $region77: #{simple_dnn_forward.1} parent=0 // pred_fallthru
    _
  // Predicated region
  $region78: #{simple_dnn_forward.1} parent=0 // pred_check
    _
  $region79: #{simple_dnn_forward.1} parent=0 // pred_check_branch
    %65 = sbr.rel (0) target = $region81
  $region80: #{simple_dnn_forward.1} parent=0 // pred_region
    _
  $region81: #{simple_dnn_forward.1} parent=0 // pred_fallthru
    _
  // Predicated region
  $region82: #{simple_dnn_forward.1} parent=0 // pred_check
    _
  $region83: #{simple_dnn_forward.1} parent=0 // pred_check_branch
    %67 = sbr.rel (0) target = $region85
  $region84: #{simple_dnn_forward.1} parent=0 // pred_region
    _
  $region85: #{simple_dnn_forward.1} parent=0 // pred_fallthru
    _
  %v69 = vld [vmem:[%s0] sm:$0xff]
  %v70 = vld [vmem:[%s0 + $0x8] sm:$0xff]
  %v71 = vld [vmem:[%s1] sm:$0xf]
  %v72 = vld [vmem:[%s1 + $0x4] sm:$0xf]
  %v73 = vld [vmem:[%s1 + $0x8] sm:$0xf]
  %v74 = vld [vmem:[%s1 + $0xc] sm:$0xf]
  %v75 = vld [vmem:[%s1 + $0x10] sm:$0xf]
  %v76 = vld [vmem:[%s1 + $0x14] sm:$0xf]
  %v77 = vld [vmem:[%s1 + $0x18] sm:$0xf]
  %v78 = vld [vmem:[%s1 + $0x1c] sm:$0xf]
  %v79 = vld [vmem:[%s1 + $0x20] sm:$0xf]
  %v80 = vld [vmem:[%s1 + $0x24] sm:$0xf]
  %v81 = vld [vmem:[%s1 + $0x28] sm:$0xf]
  %v82 = vld [vmem:[%s1 + $0x2c] sm:$0xf]
  %v83 = vld [vmem:[%s1 + $0x30] sm:$0xf]
  %v84 = vld [vmem:[%s1 + $0x34] sm:$0xf]
  %v85 = vld [vmem:[%s1 + $0x38] sm:$0xf]
  %v86 = vld [vmem:[%s1 + $0x3c] sm:$0xf]
  %v87 = vld [vmem:[%s2] sm:$0x1]
  %v88 = vpack.c.bf16 %v70, %v69
  %v90 = vlaneseq
  %v91 = vshrl.u32 %v90, 7
  %v92 = vsub.s32 0, %v91
  %v93 = vrot.slane %v87, %v92
  %v111 = vunpack.c.l.b16 %v71
  %v112 = vunpack.c.l.b16 %v72
  %v113 = vunpack.c.l.b16 %v73
  %v114 = vunpack.c.l.b16 %v74
  %v115 = vunpack.c.l.b16 %v75
  %v116 = vunpack.c.l.b16 %v76
  %v117 = vunpack.c.l.b16 %v77
  %v118 = vunpack.c.l.b16 %v78
  %v119 = vunpack.c.l.b16 %v79
  %v120 = vunpack.c.l.b16 %v80
  %v121 = vunpack.c.l.b16 %v81
  %v122 = vunpack.c.l.b16 %v82
  %v123 = vunpack.c.l.b16 %v83
  %v124 = vunpack.c.l.b16 %v84
  %v125 = vunpack.c.l.b16 %v85
  %v126 = vunpack.c.l.b16 %v86
  %v127 = vpack.c.b16 %v112, %v111
  %v128 = vpack.c.b16 %v114, %v113
  %v129 = vpack.c.b16 %v116, %v115
  %v130 = vpack.c.b16 %v118, %v117
  %v131 = vpack.c.b16 %v120, %v119
  %v132 = vpack.c.b16 %v122, %v121
  %v133 = vpack.c.b16 %v124, %v123
  %v134 = vpack.c.b16 %v126, %v125
  %143 = vmatprep.subr.bf16.mxu0 0
  %144 = vmatpush1.bf16.msra.mxu0 %v134
  %145 = vmatprep.subr.bf16.mxu0 0
  %146 = vmatpush1.bf16.msra.mxu0 %v133
  %147 = vmatprep.subr.bf16.mxu0 0
  %148 = vmatpush1.bf16.msra.mxu0 %v132
  %149 = vmatprep.subr.bf16.mxu0 0
  %150 = vmatpush1.bf16.msra.mxu0 %v131
  %151 = vmatprep.subr.bf16.mxu0 0
  %152 = vmatpush1.bf16.msra.mxu0 %v130
  %153 = vmatprep.subr.bf16.mxu0 0
  %154 = vmatpush1.bf16.msra.mxu0 %v129
  %155 = vmatprep.subr.bf16.mxu0 0
  %156 = vmatpush1.bf16.msra.mxu0 %v128
  %157 = vmatprep.subr.bf16.mxu0 0
  %158 = vmatpush1.bf16.msra.mxu0 %v127
  %159 = vmatprep.subr.bf16.mxu0 0
  %160 = vmatpush2.bf16.msra.mxu0 0
  %161 = vmatprep.subr.bf16.mxu0 0
  %162 = vmatpush2.bf16.msra.mxu0 0
  %163 = vmatprep.subr.bf16.mxu0 0
  %164 = vmatpush2.bf16.msra.mxu0 0
  %165 = vmatprep.subr.bf16.mxu0 0
  %166 = vmatpush2.bf16.msra.mxu0 0
  %167 = vmatprep.subr.bf16.mxu0 0
  %168 = vmatpush2.bf16.msra.mxu0 0
  %169 = vmatprep.subr.bf16.mxu0 0
  %170 = vmatpush2.bf16.msra.mxu0 0
  %171 = vmatprep.subr.bf16.mxu0 0
  %172 = vmatpush2.bf16.msra.mxu0 0
  %173 = vmatprep.subr.bf16.mxu0 0
  %174 = vmatpush2.bf16.msra.mxu0 0
  %175 = vmatprep.mubr.bf16.mxu0 0
  %176 = vmatmul.mubr.bf16.gmra.mxu0 %v88
  %v177 = vpop.f32.mrf.mxu0
  %v178 = vadd.f32 %v93, %v177
  %v179 = vpop.f32.mrf.mxu0
  %v180 = vpop.f32.mrf.mxu0
  %v181 = vadd.f32 %v93, %v180
  %v182 = vpop.f32.mrf.mxu0
  %183 = vdwg.mxu0
  %v184 = vmax.f32 %v178, 0.0
  %v185 = vmax.f32 %v181, 0.0
  %v186 = vld [vmem:[%s3] sm:$0xf]
  %v187 = vld [vmem:[%s3 + $0x4] sm:$0xf]
  %v188 = vld [vmem:[%s3 + $0x8] sm:$0xf]
  %v189 = vld [vmem:[%s3 + $0xc] sm:$0xf]
  %v190 = vld [vmem:[%s3 + $0x10] sm:$0xf]
  %v191 = vld [vmem:[%s3 + $0x14] sm:$0xf]
  %v192 = vld [vmem:[%s3 + $0x18] sm:$0xf]
  %v193 = vld [vmem:[%s3 + $0x1c] sm:$0xf]
  %v194 = vld [vmem:[%s3 + $0x20] sm:$0xf]
  %v195 = vld [vmem:[%s3 + $0x24] sm:$0xf]
  %v196 = vld [vmem:[%s3 + $0x28] sm:$0xf]
  %v197 = vld [vmem:[%s3 + $0x2c] sm:$0xf]
  %v198 = vld [vmem:[%s3 + $0x30] sm:$0xf]
  %v199 = vld [vmem:[%s3 + $0x34] sm:$0xf]
  %v200 = vld [vmem:[%s3 + $0x38] sm:$0xf]
  %v201 = vld [vmem:[%s3 + $0x3c] sm:$0xf]
  %v202 = vld [vmem:[%s4] sm:$0x1]
  %v203 = vpack.c.bf16 %v185, %v184
  %v205 = vlaneseq
  %v206 = vshrl.u32 %v205, 7
  %v207 = vsub.s32 0, %v206
  %v208 = vrot.slane %v202, %v207
  %v226 = vunpack.c.l.b16 %v186
  %v227 = vunpack.c.l.b16 %v187
  %v228 = vunpack.c.l.b16 %v188
  %v229 = vunpack.c.l.b16 %v189
  %v230 = vunpack.c.l.b16 %v190
  %v231 = vunpack.c.l.b16 %v191
  %v232 = vunpack.c.l.b16 %v192
  %v233 = vunpack.c.l.b16 %v193
  %v234 = vunpack.c.l.b16 %v194
  %v235 = vunpack.c.l.b16 %v195
  %v236 = vunpack.c.l.b16 %v196
  %v237 = vunpack.c.l.b16 %v197
  %v238 = vunpack.c.l.b16 %v198
  %v239 = vunpack.c.l.b16 %v199
  %v240 = vunpack.c.l.b16 %v200
  %v241 = vunpack.c.l.b16 %v201
  %v242 = vpack.c.b16 %v227, %v226
  %v243 = vpack.c.b16 %v229, %v228
  %v244 = vpack.c.b16 %v231, %v230
  %v245 = vpack.c.b16 %v233, %v232
  %v246 = vpack.c.b16 %v235, %v234
  %v247 = vpack.c.b16 %v237, %v236
  %v248 = vpack.c.b16 %v239, %v238
  %v249 = vpack.c.b16 %v241, %v240
  %258 = vmatprep.subr.bf16.mxu0 0
  %259 = vmatpush1.bf16.msra.mxu0 %v249
  %260 = vmatprep.subr.bf16.mxu0 0
  %261 = vmatpush1.bf16.msra.mxu0 %v248
  %262 = vmatprep.subr.bf16.mxu0 0
  %263 = vmatpush1.bf16.msra.mxu0 %v247
  %264 = vmatprep.subr.bf16.mxu0 0
  %265 = vmatpush1.bf16.msra.mxu0 %v246
  %266 = vmatprep.subr.bf16.mxu0 0
  %267 = vmatpush1.bf16.msra.mxu0 %v245
  %268 = vmatprep.subr.bf16.mxu0 0
  %269 = vmatpush1.bf16.msra.mxu0 %v244
  %270 = vmatprep.subr.bf16.mxu0 0
  %271 = vmatpush1.bf16.msra.mxu0 %v243
  %272 = vmatprep.subr.bf16.mxu0 0
  %273 = vmatpush1.bf16.msra.mxu0 %v242
  %274 = vmatprep.subr.bf16.mxu0 0
  %275 = vmatpush2.bf16.msra.mxu0 0
  %276 = vmatprep.subr.bf16.mxu0 0
  %277 = vmatpush2.bf16.msra.mxu0 0
  %278 = vmatprep.subr.bf16.mxu0 0
  %279 = vmatpush2.bf16.msra.mxu0 0
  %280 = vmatprep.subr.bf16.mxu0 0
  %281 = vmatpush2.bf16.msra.mxu0 0
  %282 = vmatprep.subr.bf16.mxu0 0
  %283 = vmatpush2.bf16.msra.mxu0 0
  %284 = vmatprep.subr.bf16.mxu0 0
  %285 = vmatpush2.bf16.msra.mxu0 0
  %286 = vmatprep.subr.bf16.mxu0 0
  %287 = vmatpush2.bf16.msra.mxu0 0
  %288 = vmatprep.subr.bf16.mxu0 0
  %289 = vmatpush2.bf16.msra.mxu0 0
  %290 = vmatprep.mubr.bf16.mxu0 0
  %291 = vmatmul.mubr.bf16.gmra.mxu0 %v203
  %v292 = vpop.f32.mrf.mxu0
  %v293 = vadd.f32 %v208, %v292
  %v294 = vpop.f32.mrf.mxu0
  %v295 = vpop.f32.mrf.mxu0
  %v296 = vadd.f32 %v208, %v295
  %v297 = vpop.f32.mrf.mxu0
  %298 = vdwg.mxu0
  %v299 = vmax.f32 %v293, 0.0
  %v300 = vmax.f32 %v296, 0.0
  %v301 = vld [vmem:[%s5] sm:$0xff]
  %v302 = vld [vmem:[%s5 + $0x8] sm:$0xff]
  %v303 = vld [vmem:[%s5 + $0x10] sm:$0xff]
  %v304 = vld [vmem:[%s5 + $0x18] sm:$0xff]
  %v305 = vld [vmem:[%s5 + $0x20] sm:$0xff]
  %v306 = vld [vmem:[%s5 + $0x28] sm:$0xff]
  %v307 = vld [vmem:[%s5 + $0x30] sm:$0xff]
  %v308 = vld [vmem:[%s5 + $0x38] sm:$0xff]
  %v309 = vld [vmem:[%s5 + $0x40] sm:$0xff]
  %v310 = vld [vmem:[%s5 + $0x48] sm:$0xff]
  %v311 = vld [vmem:[%s5 + $0x50] sm:$0xff]
  %v312 = vld [vmem:[%s5 + $0x58] sm:$0xff]
  %v313 = vld [vmem:[%s5 + $0x60] sm:$0xff]
  %v314 = vld [vmem:[%s5 + $0x68] sm:$0xff]
  %v315 = vld [vmem:[%s5 + $0x70] sm:$0xff]
  %v316 = vld [vmem:[%s5 + $0x78] sm:$0xff]
  %v317 = vld [vmem:[%s6] sm:$0x3]
  %v318 = vpack.c.bf16 %v300, %v299
  %v320 = vlaneseq
  %v321 = vshrl.u32 %v320, 7
  %v322 = vsub.s32 0, %v321
  %v323 = vrot.slane %v317, %v322
  %v324 = vlaneseq
  %v325 = vshrl.u32 %v324, 7
  %v326 = vsub.s32 1, %v325
  %v327 = vrot.slane %v317, %v326
  %v346 = vunpack.c.l.b16 %v301
  %v347 = vunpack.c.h.b16 %v301
  %v348 = vunpack.c.l.b16 %v302
  %v349 = vunpack.c.h.b16 %v302
  %v350 = vunpack.c.l.b16 %v303
  %v351 = vunpack.c.h.b16 %v303
  %v352 = vunpack.c.l.b16 %v304
  %v353 = vunpack.c.h.b16 %v304
  %v354 = vunpack.c.l.b16 %v305
  %v355 = vunpack.c.h.b16 %v305
  %v356 = vunpack.c.l.b16 %v306
  %v357 = vunpack.c.h.b16 %v306
  %v358 = vunpack.c.l.b16 %v307
  %v359 = vunpack.c.h.b16 %v307
  %v360 = vunpack.c.l.b16 %v308
  %v361 = vunpack.c.h.b16 %v308
  %v362 = vunpack.c.l.b16 %v309
  %v363 = vunpack.c.h.b16 %v309
  %v364 = vunpack.c.l.b16 %v310
  %v365 = vunpack.c.h.b16 %v310
  %v366 = vunpack.c.l.b16 %v311
  %v367 = vunpack.c.h.b16 %v311
  %v368 = vunpack.c.l.b16 %v312
  %v369 = vunpack.c.h.b16 %v312
  %v370 = vunpack.c.l.b16 %v313
  %v371 = vunpack.c.h.b16 %v313
  %v372 = vunpack.c.l.b16 %v314
  %v373 = vunpack.c.h.b16 %v314
  %v374 = vunpack.c.l.b16 %v315
  %v375 = vunpack.c.h.b16 %v315
  %v376 = vunpack.c.l.b16 %v316
  %v377 = vunpack.c.h.b16 %v316
  %v378 = vpack.c.b16 %v348, %v346
  %v379 = vpack.c.b16 %v349, %v347
  %v380 = vpack.c.b16 %v352, %v350
  %v381 = vpack.c.b16 %v353, %v351
  %v382 = vpack.c.b16 %v356, %v354
  %v383 = vpack.c.b16 %v357, %v355
  %v384 = vpack.c.b16 %v360, %v358
  %v385 = vpack.c.b16 %v361, %v359
  %v386 = vpack.c.b16 %v364, %v362
  %v387 = vpack.c.b16 %v365, %v363
  %v388 = vpack.c.b16 %v368, %v366
  %v389 = vpack.c.b16 %v369, %v367
  %v390 = vpack.c.b16 %v372, %v370
  %v391 = vpack.c.b16 %v373, %v371
  %v392 = vpack.c.b16 %v376, %v374
  %v393 = vpack.c.b16 %v377, %v375
  %410 = vmatprep.subr.bf16.mxu0 %v393
  %411 = vmatpush1.bf16.msra.mxu0 %v392
  %412 = vmatprep.subr.bf16.mxu0 %v391
  %413 = vmatpush1.bf16.msra.mxu0 %v390
  %414 = vmatprep.subr.bf16.mxu0 %v389
  %415 = vmatpush1.bf16.msra.mxu0 %v388
  %416 = vmatprep.subr.bf16.mxu0 %v387
  %417 = vmatpush1.bf16.msra.mxu0 %v386
  %418 = vmatprep.subr.bf16.mxu0 %v385
  %419 = vmatpush1.bf16.msra.mxu0 %v384
  %420 = vmatprep.subr.bf16.mxu0 %v383
  %421 = vmatpush1.bf16.msra.mxu0 %v382
  %422 = vmatprep.subr.bf16.mxu0 %v381
  %423 = vmatpush1.bf16.msra.mxu0 %v380
  %424 = vmatprep.subr.bf16.mxu0 %v379
  %425 = vmatpush1.bf16.msra.mxu0 %v378
  %426 = vmatprep.subr.bf16.mxu0 0
  %427 = vmatpush2.bf16.msra.mxu0 0
  %428 = vmatprep.subr.bf16.mxu0 0
  %429 = vmatpush2.bf16.msra.mxu0 0
  %430 = vmatprep.subr.bf16.mxu0 0
  %431 = vmatpush2.bf16.msra.mxu0 0
  %432 = vmatprep.subr.bf16.mxu0 0
  %433 = vmatpush2.bf16.msra.mxu0 0
  %434 = vmatprep.subr.bf16.mxu0 0
  %435 = vmatpush2.bf16.msra.mxu0 0
  %436 = vmatprep.subr.bf16.mxu0 0
  %437 = vmatpush2.bf16.msra.mxu0 0
  %438 = vmatprep.subr.bf16.mxu0 0
  %439 = vmatpush2.bf16.msra.mxu0 0
  %440 = vmatprep.subr.bf16.mxu0 0
  %441 = vmatpush2.bf16.msra.mxu0 0
  %442 = vmatprep.mubr.bf16.mxu0 0
  %443 = vmatmul.mubr.bf16.gmra.mxu0 %v318
  %v444 = vpop.f32.mrf.mxu0
  %v445 = vadd.f32 %v323, %v444
  %v446 = vpop.f32.mrf.mxu0
  %v447 = vadd.f32 %v327, %v446
  %v448 = vpop.f32.mrf.mxu0
  %v449 = vadd.f32 %v323, %v448
  %v450 = vpop.f32.mrf.mxu0
  %v451 = vadd.f32 %v327, %v450
  %452 = vdwg.mxu0
  %v453 = vmax.f32 %v445, 0.0
  %v454 = vmax.f32 %v447, 0.0
  %v455 = vmax.f32 %v449, 0.0
  %v456 = vmax.f32 %v451, 0.0
  %v457 = vld [vmem:[%s7] sm:$0xff]
  %v458 = vld [vmem:[%s7 + $0x8] sm:$0xff]
  %v459 = vld [vmem:[%s7 + $0x10] sm:$0xff]
  %v460 = vld [vmem:[%s7 + $0x18] sm:$0xff]
  %v461 = vld [vmem:[%s7 + $0x20] sm:$0xff]
  %v462 = vld [vmem:[%s7 + $0x28] sm:$0xff]
  %v463 = vld [vmem:[%s7 + $0x30] sm:$0xff]
  %v464 = vld [vmem:[%s7 + $0x38] sm:$0xff]
  %v465 = vld [vmem:[%s7 + $0x40] sm:$0xff]
  %v466 = vld [vmem:[%s7 + $0x48] sm:$0xff]
  %v467 = vld [vmem:[%s7 + $0x50] sm:$0xff]
  %v468 = vld [vmem:[%s7 + $0x58] sm:$0xff]
  %v469 = vld [vmem:[%s7 + $0x60] sm:$0xff]
  %v470 = vld [vmem:[%s7 + $0x68] sm:$0xff]
  %v471 = vld [vmem:[%s7 + $0x70] sm:$0xff]
  %v472 = vld [vmem:[%s7 + $0x78] sm:$0xff]
  %v473 = vld [vmem:[%s7 + $0x80] sm:$0xff]
  %v474 = vld [vmem:[%s7 + $0x88] sm:$0xff]
  %v475 = vld [vmem:[%s7 + $0x90] sm:$0xff]
  %v476 = vld [vmem:[%s7 + $0x98] sm:$0xff]
  %v477 = vld [vmem:[%s7 + $0xa0] sm:$0xff]
  %v478 = vld [vmem:[%s7 + $0xa8] sm:$0xff]
  %v479 = vld [vmem:[%s7 + $0xb0] sm:$0xff]
  %v480 = vld [vmem:[%s7 + $0xb8] sm:$0xff]
  %v481 = vld [vmem:[%s7 + $0xc0] sm:$0xff]
  %v482 = vld [vmem:[%s7 + $0xc8] sm:$0xff]
  %v483 = vld [vmem:[%s7 + $0xd0] sm:$0xff]
  %v484 = vld [vmem:[%s7 + $0xd8] sm:$0xff]
  %v485 = vld [vmem:[%s7 + $0xe0] sm:$0xff]
  %v486 = vld [vmem:[%s7 + $0xe8] sm:$0xff]
  %v487 = vld [vmem:[%s7 + $0xf0] sm:$0xff]
  %v488 = vld [vmem:[%s7 + $0xf8] sm:$0xff]
  %v489 = vld [vmem:[%s8] sm:$0x3]
  %v490 = vpack.c.bf16 %v455, %v453
  %v491 = vpack.c.bf16 %v456, %v454
  %v493 = vlaneseq
  %v494 = vshrl.u32 %v493, 7
  %v495 = vsub.s32 0, %v494
  %v496 = vrot.slane %v489, %v495
  %v497 = vlaneseq
  %v498 = vshrl.u32 %v497, 7
  %v499 = vsub.s32 1, %v498
  %v500 = vrot.slane %v489, %v499
  %v535 = vunpack.c.l.b16 %v457
  %v536 = vunpack.c.h.b16 %v457
  %v537 = vunpack.c.l.b16 %v458
  %v538 = vunpack.c.h.b16 %v458
  %v539 = vunpack.c.l.b16 %v459
  %v540 = vunpack.c.h.b16 %v459
  %v541 = vunpack.c.l.b16 %v460
  %v542 = vunpack.c.h.b16 %v460
  %v543 = vunpack.c.l.b16 %v461
  %v544 = vunpack.c.h.b16 %v461
  %v545 = vunpack.c.l.b16 %v462
  %v546 = vunpack.c.h.b16 %v462
  %v547 = vunpack.c.l.b16 %v463
  %v548 = vunpack.c.h.b16 %v463
  %v549 = vunpack.c.l.b16 %v464
  %v550 = vunpack.c.h.b16 %v464
  %v551 = vunpack.c.l.b16 %v465
  %v552 = vunpack.c.h.b16 %v465
  %v553 = vunpack.c.l.b16 %v466
  %v554 = vunpack.c.h.b16 %v466
  %v555 = vunpack.c.l.b16 %v467
  %v556 = vunpack.c.h.b16 %v467
  %v557 = vunpack.c.l.b16 %v468
  %v558 = vunpack.c.h.b16 %v468
  %v559 = vunpack.c.l.b16 %v469
  %v560 = vunpack.c.h.b16 %v469
  %v561 = vunpack.c.l.b16 %v470
  %v562 = vunpack.c.h.b16 %v470
  %v563 = vunpack.c.l.b16 %v471
  %v564 = vunpack.c.h.b16 %v471
  %v565 = vunpack.c.l.b16 %v472
  %v566 = vunpack.c.h.b16 %v472
  %v567 = vunpack.c.l.b16 %v473
  %v568 = vunpack.c.h.b16 %v473
  %v569 = vunpack.c.l.b16 %v474
  %v570 = vunpack.c.h.b16 %v474
  %v571 = vunpack.c.l.b16 %v475
  %v572 = vunpack.c.h.b16 %v475
  %v573 = vunpack.c.l.b16 %v476
  %v574 = vunpack.c.h.b16 %v476
  %v575 = vunpack.c.l.b16 %v477
  %v576 = vunpack.c.h.b16 %v477
  %v577 = vunpack.c.l.b16 %v478
  %v578 = vunpack.c.h.b16 %v478
  %v579 = vunpack.c.l.b16 %v479
  %v580 = vunpack.c.h.b16 %v479
  %v581 = vunpack.c.l.b16 %v480
  %v582 = vunpack.c.h.b16 %v480
  %v583 = vunpack.c.l.b16 %v481
  %v584 = vunpack.c.h.b16 %v481
  %v585 = vunpack.c.l.b16 %v482
  %v586 = vunpack.c.h.b16 %v482
  %v587 = vunpack.c.l.b16 %v483
  %v588 = vunpack.c.h.b16 %v483
  %v589 = vunpack.c.l.b16 %v484
  %v590 = vunpack.c.h.b16 %v484
  %v591 = vunpack.c.l.b16 %v485
  %v592 = vunpack.c.h.b16 %v485
  %v593 = vunpack.c.l.b16 %v486
  %v594 = vunpack.c.h.b16 %v486
  %v595 = vunpack.c.l.b16 %v487
  %v596 = vunpack.c.h.b16 %v487
  %v597 = vunpack.c.l.b16 %v488
  %v598 = vunpack.c.h.b16 %v488
  %v599 = vpack.c.b16 %v537, %v535
  %v600 = vpack.c.b16 %v538, %v536
  %v601 = vpack.c.b16 %v541, %v539
  %v602 = vpack.c.b16 %v542, %v540
  %v603 = vpack.c.b16 %v545, %v543
  %v604 = vpack.c.b16 %v546, %v544
  %v605 = vpack.c.b16 %v549, %v547
  %v606 = vpack.c.b16 %v550, %v548
  %v607 = vpack.c.b16 %v553, %v551
  %v608 = vpack.c.b16 %v554, %v552
  %v609 = vpack.c.b16 %v557, %v555
  %v610 = vpack.c.b16 %v558, %v556
  %v611 = vpack.c.b16 %v561, %v559
  %v612 = vpack.c.b16 %v562, %v560
  %v613 = vpack.c.b16 %v565, %v563
  %v614 = vpack.c.b16 %v566, %v564
  %v615 = vpack.c.b16 %v569, %v567
  %v616 = vpack.c.b16 %v570, %v568
  %v617 = vpack.c.b16 %v573, %v571
  %v618 = vpack.c.b16 %v574, %v572
  %v619 = vpack.c.b16 %v577, %v575
  %v620 = vpack.c.b16 %v578, %v576
  %v621 = vpack.c.b16 %v581, %v579
  %v622 = vpack.c.b16 %v582, %v580
  %v623 = vpack.c.b16 %v585, %v583
  %v624 = vpack.c.b16 %v586, %v584
  %v625 = vpack.c.b16 %v589, %v587
  %v626 = vpack.c.b16 %v590, %v588
  %v627 = vpack.c.b16 %v593, %v591
  %v628 = vpack.c.b16 %v594, %v592
  %v629 = vpack.c.b16 %v597, %v595
  %v630 = vpack.c.b16 %v598, %v596
  %663 = vmatprep.subr.bf16.mxu0 %v614
  %664 = vmatpush1.bf16.msra.mxu0 %v613
  %665 = vmatprep.subr.bf16.mxu0 %v612
  %666 = vmatpush1.bf16.msra.mxu0 %v611
  %667 = vmatprep.subr.bf16.mxu0 %v610
  %668 = vmatpush1.bf16.msra.mxu0 %v609
  %669 = vmatprep.subr.bf16.mxu0 %v608
  %670 = vmatpush1.bf16.msra.mxu0 %v607
  %671 = vmatprep.subr.bf16.mxu0 %v606
  %672 = vmatpush1.bf16.msra.mxu0 %v605
  %673 = vmatprep.subr.bf16.mxu0 %v604
  %674 = vmatpush1.bf16.msra.mxu0 %v603
  %675 = vmatprep.subr.bf16.mxu0 %v602
  %676 = vmatpush1.bf16.msra.mxu0 %v601
  %677 = vmatprep.subr.bf16.mxu0 %v600
  %678 = vmatpush1.bf16.msra.mxu0 %v599
  %679 = vmatprep.subr.bf16.mxu0 %v630
  %680 = vmatpush2.bf16.msra.mxu0 %v629
  %681 = vmatprep.subr.bf16.mxu0 %v628
  %682 = vmatpush2.bf16.msra.mxu0 %v627
  %683 = vmatprep.subr.bf16.mxu0 %v626
  %684 = vmatpush2.bf16.msra.mxu0 %v625
  %685 = vmatprep.subr.bf16.mxu0 %v624
  %686 = vmatpush2.bf16.msra.mxu0 %v623
  %687 = vmatprep.subr.bf16.mxu0 %v622
  %688 = vmatpush2.bf16.msra.mxu0 %v621
  %689 = vmatprep.subr.bf16.mxu0 %v620
  %690 = vmatpush2.bf16.msra.mxu0 %v619
  %691 = vmatprep.subr.bf16.mxu0 %v618
  %692 = vmatpush2.bf16.msra.mxu0 %v617
  %693 = vmatprep.subr.bf16.mxu0 %v616
  %694 = vmatpush2.bf16.msra.mxu0 %v615
  %695 = vmatprep.mubr.bf16.mxu0 %v491
  %696 = vmatmul.mubr.bf16.gmra.mxu0 %v490
  %v697 = vpop.f32.mrf.mxu0
  %v698 = vadd.f32 %v496, %v697
  %v699 = vpop.f32.mrf.mxu0
  %v700 = vadd.f32 %v500, %v699
  %v701 = vpop.f32.mrf.mxu0
  %v702 = vadd.f32 %v496, %v701
  %v703 = vpop.f32.mrf.mxu0
  %v704 = vadd.f32 %v500, %v703
  %705 = vdwg.mxu0
  %v706 = vmax.f32 %v698, 0.0
  %v707 = vmax.f32 %v700, 0.0
  %v708 = vmax.f32 %v702, 0.0
  %v709 = vmax.f32 %v704, 0.0
  %v710 = vld [vmem:[%s9] sm:$0xf]
  %v711 = vld [vmem:[%s9 + $0x4] sm:$0xf]
  %v712 = vld [vmem:[%s9 + $0x8] sm:$0xf]
  %v713 = vld [vmem:[%s9 + $0xc] sm:$0xf]
  %v714 = vld [vmem:[%s9 + $0x10] sm:$0xf]
  %v715 = vld [vmem:[%s9 + $0x14] sm:$0xf]
  %v716 = vld [vmem:[%s9 + $0x18] sm:$0xf]
  %v717 = vld [vmem:[%s9 + $0x1c] sm:$0xf]
  %v718 = vld [vmem:[%s9 + $0x20] sm:$0xf]
  %v719 = vld [vmem:[%s9 + $0x24] sm:$0xf]
  %v720 = vld [vmem:[%s9 + $0x28] sm:$0xf]
  %v721 = vld [vmem:[%s9 + $0x2c] sm:$0xf]
  %v722 = vld [vmem:[%s9 + $0x30] sm:$0xf]
  %v723 = vld [vmem:[%s9 + $0x34] sm:$0xf]
  %v724 = vld [vmem:[%s9 + $0x38] sm:$0xf]
  %v725 = vld [vmem:[%s9 + $0x3c] sm:$0xf]
  %v726 = vld [vmem:[%s9 + $0x40] sm:$0xf]
  %v727 = vld [vmem:[%s9 + $0x44] sm:$0xf]
  %v728 = vld [vmem:[%s9 + $0x48] sm:$0xf]
  %v729 = vld [vmem:[%s9 + $0x4c] sm:$0xf]
  %v730 = vld [vmem:[%s9 + $0x50] sm:$0xf]
  %v731 = vld [vmem:[%s9 + $0x54] sm:$0xf]
  %v732 = vld [vmem:[%s9 + $0x58] sm:$0xf]
  %v733 = vld [vmem:[%s9 + $0x5c] sm:$0xf]
  %v734 = vld [vmem:[%s9 + $0x60] sm:$0xf]
  %v735 = vld [vmem:[%s9 + $0x64] sm:$0xf]
  %v736 = vld [vmem:[%s9 + $0x68] sm:$0xf]
  %v737 = vld [vmem:[%s9 + $0x6c] sm:$0xf]
  %v738 = vld [vmem:[%s9 + $0x70] sm:$0xf]
  %v739 = vld [vmem:[%s9 + $0x74] sm:$0xf]
  %v740 = vld [vmem:[%s9 + $0x78] sm:$0xf]
  %v741 = vld [vmem:[%s9 + $0x7c] sm:$0xf]
  %v742 = vld [vmem:[%s10] sm:$0x1]
  %v743 = vpack.c.bf16 %v708, %v706
  %v744 = vpack.c.bf16 %v709, %v707
  %v746 = vlaneseq
  %v747 = vshrl.u32 %v746, 7
  %v748 = vsub.s32 0, %v747
  %v749 = vrot.slane %v742, %v748
  %v783 = vunpack.c.l.b16 %v710
  %v784 = vunpack.c.l.b16 %v711
  %v785 = vunpack.c.l.b16 %v712
  %v786 = vunpack.c.l.b16 %v713
  %v787 = vunpack.c.l.b16 %v714
  %v788 = vunpack.c.l.b16 %v715
  %v789 = vunpack.c.l.b16 %v716
  %v790 = vunpack.c.l.b16 %v717
  %v791 = vunpack.c.l.b16 %v718
  %v792 = vunpack.c.l.b16 %v719
  %v793 = vunpack.c.l.b16 %v720
  %v794 = vunpack.c.l.b16 %v721
  %v795 = vunpack.c.l.b16 %v722
  %v796 = vunpack.c.l.b16 %v723
  %v797 = vunpack.c.l.b16 %v724
  %v798 = vunpack.c.l.b16 %v725
  %v799 = vunpack.c.l.b16 %v726
  %v800 = vunpack.c.l.b16 %v727
  %v801 = vunpack.c.l.b16 %v728
  %v802 = vunpack.c.l.b16 %v729
  %v803 = vunpack.c.l.b16 %v730
  %v804 = vunpack.c.l.b16 %v731
  %v805 = vunpack.c.l.b16 %v732
  %v806 = vunpack.c.l.b16 %v733
  %v807 = vunpack.c.l.b16 %v734
  %v808 = vunpack.c.l.b16 %v735
  %v809 = vunpack.c.l.b16 %v736
  %v810 = vunpack.c.l.b16 %v737
  %v811 = vunpack.c.l.b16 %v738
  %v812 = vunpack.c.l.b16 %v739
  %v813 = vunpack.c.l.b16 %v740
  %v814 = vunpack.c.l.b16 %v741
  %v815 = vpack.c.b16 %v784, %v783
  %v816 = vpack.c.b16 %v786, %v785
  %v817 = vpack.c.b16 %v788, %v787
  %v818 = vpack.c.b16 %v790, %v789
  %v819 = vpack.c.b16 %v792, %v791
  %v820 = vpack.c.b16 %v794, %v793
  %v821 = vpack.c.b16 %v796, %v795
  %v822 = vpack.c.b16 %v798, %v797
  %v823 = vpack.c.b16 %v800, %v799
  %v824 = vpack.c.b16 %v802, %v801
  %v825 = vpack.c.b16 %v804, %v803
  %v826 = vpack.c.b16 %v806, %v805
  %v827 = vpack.c.b16 %v808, %v807
  %v828 = vpack.c.b16 %v810, %v809
  %v829 = vpack.c.b16 %v812, %v811
  %v830 = vpack.c.b16 %v814, %v813
  %847 = vmatprep.subr.bf16.mxu0 0
  %848 = vmatpush1.bf16.msra.mxu0 %v822
  %849 = vmatprep.subr.bf16.mxu0 0
  %850 = vmatpush1.bf16.msra.mxu0 %v821
  %851 = vmatprep.subr.bf16.mxu0 0
  %852 = vmatpush1.bf16.msra.mxu0 %v820
  %853 = vmatprep.subr.bf16.mxu0 0
  %854 = vmatpush1.bf16.msra.mxu0 %v819
  %855 = vmatprep.subr.bf16.mxu0 0
  %856 = vmatpush1.bf16.msra.mxu0 %v818
  %857 = vmatprep.subr.bf16.mxu0 0
  %858 = vmatpush1.bf16.msra.mxu0 %v817
  %859 = vmatprep.subr.bf16.mxu0 0
  %860 = vmatpush1.bf16.msra.mxu0 %v816
  %861 = vmatprep.subr.bf16.mxu0 0
  %862 = vmatpush1.bf16.msra.mxu0 %v815
  %863 = vmatprep.subr.bf16.mxu0 0
  %864 = vmatpush2.bf16.msra.mxu0 %v830
  %865 = vmatprep.subr.bf16.mxu0 0
  %866 = vmatpush2.bf16.msra.mxu0 %v829
  %867 = vmatprep.subr.bf16.mxu0 0
  %868 = vmatpush2.bf16.msra.mxu0 %v828
  %869 = vmatprep.subr.bf16.mxu0 0
  %870 = vmatpush2.bf16.msra.mxu0 %v827
  %871 = vmatprep.subr.bf16.mxu0 0
  %872 = vmatpush2.bf16.msra.mxu0 %v826
  %873 = vmatprep.subr.bf16.mxu0 0
  %874 = vmatpush2.bf16.msra.mxu0 %v825
  %875 = vmatprep.subr.bf16.mxu0 0
  %876 = vmatpush2.bf16.msra.mxu0 %v824
  %877 = vmatprep.subr.bf16.mxu0 0
  %878 = vmatpush2.bf16.msra.mxu0 %v823
  %879 = vmatprep.mubr.bf16.mxu0 %v744
  %880 = vmatmul.mubr.bf16.gmra.mxu0 %v743
  %v881 = vpop.f32.mrf.mxu0
  %v882 = vadd.f32 %v749, %v881
  %v883 = vpop.f32.mrf.mxu0
  %v884 = vpop.f32.mrf.mxu0
  %v885 = vadd.f32 %v749, %v884
  %v886 = vpop.f32.mrf.mxu0
  %887 = vdwg.mxu0
  %v888 = vmax.f32 %v882, 0.0
  %v889 = vmax.f32 %v885, 0.0
  %v890 = vld [vmem:[%s11] sm:$0xf]
  %v891 = vld [vmem:[%s11 + $0x4] sm:$0xf]
  %v892 = vld [vmem:[%s11 + $0x8] sm:$0xf]
  %v893 = vld [vmem:[%s11 + $0xc] sm:$0xf]
  %v894 = vld [vmem:[%s11 + $0x10] sm:$0xf]
  %v895 = vld [vmem:[%s11 + $0x14] sm:$0xf]
  %v896 = vld [vmem:[%s11 + $0x18] sm:$0xf]
  %v897 = vld [vmem:[%s11 + $0x1c] sm:$0xf]
  %v898 = vld [vmem:[%s11 + $0x20] sm:$0xf]
  %v899 = vld [vmem:[%s11 + $0x24] sm:$0xf]
  %v900 = vld [vmem:[%s11 + $0x28] sm:$0xf]
  %v901 = vld [vmem:[%s11 + $0x2c] sm:$0xf]
  %v902 = vld [vmem:[%s11 + $0x30] sm:$0xf]
  %v903 = vld [vmem:[%s11 + $0x34] sm:$0xf]
  %v904 = vld [vmem:[%s11 + $0x38] sm:$0xf]
  %v905 = vld [vmem:[%s11 + $0x3c] sm:$0xf]
  %v906 = vld [vmem:[%s12] sm:$0x1]
  %v907 = vpack.c.bf16 %v889, %v888
  %v909 = vlaneseq
  %v910 = vshrl.u32 %v909, 7
  %v911 = vsub.s32 0, %v910
  %v912 = vrot.slane %v906, %v911
  %v930 = vunpack.c.l.b16 %v890
  %v931 = vunpack.c.l.b16 %v891
  %v932 = vunpack.c.l.b16 %v892
  %v933 = vunpack.c.l.b16 %v893
  %v934 = vunpack.c.l.b16 %v894
  %v935 = vunpack.c.l.b16 %v895
  %v936 = vunpack.c.l.b16 %v896
  %v937 = vunpack.c.l.b16 %v897
  %v938 = vunpack.c.l.b16 %v898
  %v939 = vunpack.c.l.b16 %v899
  %v940 = vunpack.c.l.b16 %v900
  %v941 = vunpack.c.l.b16 %v901
  %v942 = vunpack.c.l.b16 %v902
  %v943 = vunpack.c.l.b16 %v903
  %v944 = vunpack.c.l.b16 %v904
  %v945 = vunpack.c.l.b16 %v905
  %v946 = vpack.c.b16 %v931, %v930
  %v947 = vpack.c.b16 %v933, %v932
  %v948 = vpack.c.b16 %v935, %v934
  %v949 = vpack.c.b16 %v937, %v936
  %v950 = vpack.c.b16 %v939, %v938
  %v951 = vpack.c.b16 %v941, %v940
  %v952 = vpack.c.b16 %v943, %v942
  %v953 = vpack.c.b16 %v945, %v944
  %962 = vmatprep.subr.bf16.mxu0 0
  %963 = vmatpush1.bf16.msra.mxu0 %v953
  %964 = vmatprep.subr.bf16.mxu0 0
  %965 = vmatpush1.bf16.msra.mxu0 %v952
  %966 = vmatprep.subr.bf16.mxu0 0
  %967 = vmatpush1.bf16.msra.mxu0 %v951
  %968 = vmatprep.subr.bf16.mxu0 0
  %969 = vmatpush1.bf16.msra.mxu0 %v950
  %970 = vmatprep.subr.bf16.mxu0 0
  %971 = vmatpush1.bf16.msra.mxu0 %v949
  %972 = vmatprep.subr.bf16.mxu0 0
  %973 = vmatpush1.bf16.msra.mxu0 %v948
  %974 = vmatprep.subr.bf16.mxu0 0
  %975 = vmatpush1.bf16.msra.mxu0 %v947
  %976 = vmatprep.subr.bf16.mxu0 0
  %977 = vmatpush1.bf16.msra.mxu0 %v946
  %978 = vmatprep.subr.bf16.mxu0 0
  %979 = vmatpush2.bf16.msra.mxu0 0
  %980 = vmatprep.subr.bf16.mxu0 0
  %981 = vmatpush2.bf16.msra.mxu0 0
  %982 = vmatprep.subr.bf16.mxu0 0
  %983 = vmatpush2.bf16.msra.mxu0 0
  %984 = vmatprep.subr.bf16.mxu0 0
  %985 = vmatpush2.bf16.msra.mxu0 0
  %986 = vmatprep.subr.bf16.mxu0 0
  %987 = vmatpush2.bf16.msra.mxu0 0
  %988 = vmatprep.subr.bf16.mxu0 0
  %989 = vmatpush2.bf16.msra.mxu0 0
  %990 = vmatprep.subr.bf16.mxu0 0
  %991 = vmatpush2.bf16.msra.mxu0 0
  %992 = vmatprep.subr.bf16.mxu0 0
  %993 = vmatpush2.bf16.msra.mxu0 0
  %994 = vmatprep.mubr.bf16.mxu0 0
  %995 = vmatmul.mubr.bf16.gmra.mxu0 %v907
  %v996 = vpop.f32.mrf.mxu0
  %v997 = vadd.f32 %v912, %v996
  %v998 = vpop.f32.mrf.mxu0
  %v999 = vpop.f32.mrf.mxu0
  %v1000 = vadd.f32 %v912, %v999
  %v1001 = vpop.f32.mrf.mxu0
  %1002 = vdwg.mxu0
  %v1003 = vmax.f32 %v997, 0.0
  %v1004 = vmax.f32 %v1000, 0.0
  %v1005 = vld [vmem:[%s13] sm:$0xf]
  %v1006 = vld [vmem:[%s13 + $0x4] sm:$0xf]
  %v1007 = vld [vmem:[%s13 + $0x8] sm:$0xf]
  %v1008 = vld [vmem:[%s13 + $0xc] sm:$0xf]
  %v1009 = vld [vmem:[%s13 + $0x10] sm:$0xf]
  %v1010 = vld [vmem:[%s13 + $0x14] sm:$0xf]
  %v1011 = vld [vmem:[%s13 + $0x18] sm:$0xf]
  %v1012 = vld [vmem:[%s13 + $0x1c] sm:$0xf]
  %v1013 = vld [vmem:[%s13 + $0x20] sm:$0xf]
  %v1014 = vld [vmem:[%s13 + $0x24] sm:$0xf]
  %v1015 = vld [vmem:[%s13 + $0x28] sm:$0xf]
  %v1016 = vld [vmem:[%s13 + $0x2c] sm:$0xf]
  %v1017 = vld [vmem:[%s13 + $0x30] sm:$0xf]
  %v1018 = vld [vmem:[%s13 + $0x34] sm:$0xf]
  %v1019 = vld [vmem:[%s13 + $0x38] sm:$0xf]
  %v1020 = vld [vmem:[%s13 + $0x3c] sm:$0xf]
  %v1021 = vld [vmem:[%s14] sm:$0x1]
  %v1022 = vpack.c.bf16 %v1004, %v1003
  %v1024 = vlaneseq
  %v1025 = vshrl.u32 %v1024, 7
  %v1026 = vsub.s32 0, %v1025
  %v1027 = vrot.slane %v1021, %v1026
  %v1045 = vunpack.c.l.b16 %v1005
  %v1046 = vunpack.c.l.b16 %v1006
  %v1047 = vunpack.c.l.b16 %v1007
  %v1048 = vunpack.c.l.b16 %v1008
  %v1049 = vunpack.c.l.b16 %v1009
  %v1050 = vunpack.c.l.b16 %v1010
  %v1051 = vunpack.c.l.b16 %v1011
  %v1052 = vunpack.c.l.b16 %v1012
  %v1053 = vunpack.c.l.b16 %v1013
  %v1054 = vunpack.c.l.b16 %v1014
  %v1055 = vunpack.c.l.b16 %v1015
  %v1056 = vunpack.c.l.b16 %v1016
  %v1057 = vunpack.c.l.b16 %v1017
  %v1058 = vunpack.c.l.b16 %v1018
  %v1059 = vunpack.c.l.b16 %v1019
  %v1060 = vunpack.c.l.b16 %v1020
  %v1061 = vpack.c.b16 %v1046, %v1045
  %v1062 = vpack.c.b16 %v1048, %v1047
  %v1063 = vpack.c.b16 %v1050, %v1049
  %v1064 = vpack.c.b16 %v1052, %v1051
  %v1065 = vpack.c.b16 %v1054, %v1053
  %v1066 = vpack.c.b16 %v1056, %v1055
  %v1067 = vpack.c.b16 %v1058, %v1057
  %v1068 = vpack.c.b16 %v1060, %v1059
  %1077 = vmatprep.subr.bf16.mxu0 0
  %1078 = vmatpush1.bf16.msra.mxu0 %v1068
  %1079 = vmatprep.subr.bf16.mxu0 0
  %1080 = vmatpush1.bf16.msra.mxu0 %v1067
  %1081 = vmatprep.subr.bf16.mxu0 0
  %1082 = vmatpush1.bf16.msra.mxu0 %v1066
  %1083 = vmatprep.subr.bf16.mxu0 0
  %1084 = vmatpush1.bf16.msra.mxu0 %v1065
  %1085 = vmatprep.subr.bf16.mxu0 0
  %1086 = vmatpush1.bf16.msra.mxu0 %v1064
  %1087 = vmatprep.subr.bf16.mxu0 0
  %1088 = vmatpush1.bf16.msra.mxu0 %v1063
  %1089 = vmatprep.subr.bf16.mxu0 0
  %1090 = vmatpush1.bf16.msra.mxu0 %v1062
  %1091 = vmatprep.subr.bf16.mxu0 0
  %1092 = vmatpush1.bf16.msra.mxu0 %v1061
  %1093 = vmatprep.subr.bf16.mxu0 0
  %1094 = vmatpush2.bf16.msra.mxu0 0
  %1095 = vmatprep.subr.bf16.mxu0 0
  %1096 = vmatpush2.bf16.msra.mxu0 0
  %1097 = vmatprep.subr.bf16.mxu0 0
  %1098 = vmatpush2.bf16.msra.mxu0 0
  %1099 = vmatprep.subr.bf16.mxu0 0
  %1100 = vmatpush2.bf16.msra.mxu0 0
  %1101 = vmatprep.subr.bf16.mxu0 0
  %1102 = vmatpush2.bf16.msra.mxu0 0
  %1103 = vmatprep.subr.bf16.mxu0 0
  %1104 = vmatpush2.bf16.msra.mxu0 0
  %1105 = vmatprep.subr.bf16.mxu0 0
  %1106 = vmatpush2.bf16.msra.mxu0 0
  %1107 = vmatprep.subr.bf16.mxu0 0
  %1108 = vmatpush2.bf16.msra.mxu0 0
  %1109 = vmatprep.mubr.bf16.mxu0 0
  %1110 = vmatmul.mubr.bf16.gmra.mxu0 %v1022
  %v1111 = vpop.f32.mrf.mxu0
  %v1112 = vadd.f32 %v1027, %v1111
  %v1113 = vpop.f32.mrf.mxu0
  %v1114 = vpop.f32.mrf.mxu0
  %v1115 = vadd.f32 %v1027, %v1114
  %v1116 = vpop.f32.mrf.mxu0
  %1117 = vdwg.mxu0
  %v1118 = vmax.f32 %v1112, 0.0
  %v1119 = vmax.f32 %v1115, 0.0
  %v1120 = vld [vmem:[%s15] sm:$0xf]
  %v1121 = vld [vmem:[%s15 + $0x4] sm:$0xf]
  %v1122 = vld [vmem:[%s15 + $0x8] sm:$0xf]
  %v1123 = vld [vmem:[%s15 + $0xc] sm:$0xf]
  %v1124 = vld [vmem:[%s15 + $0x10] sm:$0xf]
  %v1125 = vld [vmem:[%s15 + $0x14] sm:$0xf]
  %v1126 = vld [vmem:[%s15 + $0x18] sm:$0xf]
  %v1127 = vld [vmem:[%s15 + $0x1c] sm:$0xf]
  %v1128 = vld [vmem:[%s15 + $0x20] sm:$0xf]
  %v1129 = vld [vmem:[%s15 + $0x24] sm:$0xf]
  %v1130 = vld [vmem:[%s15 + $0x28] sm:$0xf]
  %v1131 = vld [vmem:[%s15 + $0x2c] sm:$0xf]
  %v1132 = vld [vmem:[%s15 + $0x30] sm:$0xf]
  %v1133 = vld [vmem:[%s15 + $0x34] sm:$0xf]
  %v1134 = vld [vmem:[%s15 + $0x38] sm:$0xf]
  %v1135 = vld [vmem:[%s15 + $0x3c] sm:$0xf]
  %v1136 = vld [vmem:[%s16] sm:$0x1]
  %v1137 = vpack.c.bf16 %v1119, %v1118
  %v1139 = vlaneseq
  %v1140 = vshrl.u32 %v1139, 7
  %v1141 = vsub.s32 0, %v1140
  %v1142 = vrot.slane %v1136, %v1141
  %v1160 = vunpack.c.l.b16 %v1120
  %v1161 = vunpack.c.l.b16 %v1121
  %v1162 = vunpack.c.l.b16 %v1122
  %v1163 = vunpack.c.l.b16 %v1123
  %v1164 = vunpack.c.l.b16 %v1124
  %v1165 = vunpack.c.l.b16 %v1125
  %v1166 = vunpack.c.l.b16 %v1126
  %v1167 = vunpack.c.l.b16 %v1127
  %v1168 = vunpack.c.l.b16 %v1128
  %v1169 = vunpack.c.l.b16 %v1129
  %v1170 = vunpack.c.l.b16 %v1130
  %v1171 = vunpack.c.l.b16 %v1131
  %v1172 = vunpack.c.l.b16 %v1132
  %v1173 = vunpack.c.l.b16 %v1133
  %v1174 = vunpack.c.l.b16 %v1134
  %v1175 = vunpack.c.l.b16 %v1135
  %v1176 = vpack.c.b16 %v1161, %v1160
  %v1177 = vpack.c.b16 %v1163, %v1162
  %v1178 = vpack.c.b16 %v1165, %v1164
  %v1179 = vpack.c.b16 %v1167, %v1166
  %v1180 = vpack.c.b16 %v1169, %v1168
  %v1181 = vpack.c.b16 %v1171, %v1170
  %v1182 = vpack.c.b16 %v1173, %v1172
  %v1183 = vpack.c.b16 %v1175, %v1174
  %1192 = vmatprep.subr.bf16.mxu0 0
  %1193 = vmatpush1.bf16.msra.mxu0 %v1183
  %1194 = vmatprep.subr.bf16.mxu0 0
  %1195 = vmatpush1.bf16.msra.mxu0 %v1182
  %1196 = vmatprep.subr.bf16.mxu0 0
  %1197 = vmatpush1.bf16.msra.mxu0 %v1181
  %1198 = vmatprep.subr.bf16.mxu0 0
  %1199 = vmatpush1.bf16.msra.mxu0 %v1180
  %1200 = vmatprep.subr.bf16.mxu0 0
  %1201 = vmatpush1.bf16.msra.mxu0 %v1179
  %1202 = vmatprep.subr.bf16.mxu0 0
  %1203 = vmatpush1.bf16.msra.mxu0 %v1178
  %1204 = vmatprep.subr.bf16.mxu0 0
  %1205 = vmatpush1.bf16.msra.mxu0 %v1177
  %1206 = vmatprep.subr.bf16.mxu0 0
  %1207 = vmatpush1.bf16.msra.mxu0 %v1176
  %1208 = vmatprep.subr.bf16.mxu0 0
  %1209 = vmatpush2.bf16.msra.mxu0 0
  %1210 = vmatprep.subr.bf16.mxu0 0
  %1211 = vmatpush2.bf16.msra.mxu0 0
  %1212 = vmatprep.subr.bf16.mxu0 0
  %1213 = vmatpush2.bf16.msra.mxu0 0
  %1214 = vmatprep.subr.bf16.mxu0 0
  %1215 = vmatpush2.bf16.msra.mxu0 0
  %1216 = vmatprep.subr.bf16.mxu0 0
  %1217 = vmatpush2.bf16.msra.mxu0 0
  %1218 = vmatprep.subr.bf16.mxu0 0
  %1219 = vmatpush2.bf16.msra.mxu0 0
  %1220 = vmatprep.subr.bf16.mxu0 0
  %1221 = vmatpush2.bf16.msra.mxu0 0
  %1222 = vmatprep.subr.bf16.mxu0 0
  %1223 = vmatpush2.bf16.msra.mxu0 0
  %1224 = vmatprep.mubr.bf16.mxu0 0
  %1225 = vmatmul.mubr.bf16.gmra.mxu0 %v1137
  %v1226 = vpop.f32.mrf.mxu0
  %v1227 = vadd.f32 %v1142, %v1226
  %v1228 = vpop.f32.mrf.mxu0
  %v1229 = vpop.f32.mrf.mxu0
  %v1230 = vadd.f32 %v1142, %v1229
  %v1231 = vpop.f32.mrf.mxu0
  %1232 = vdwg.mxu0
  %v1233 = vmax.f32 %v1227, 0.0
  %v1234 = vmax.f32 %v1230, 0.0
  %v1235 = vld [vmem:[%s17] sm:$0xf]
  %v1236 = vld [vmem:[%s17 + $0x4] sm:$0xf]
  %v1237 = vld [vmem:[%s17 + $0x8] sm:$0xf]
  %v1238 = vld [vmem:[%s17 + $0xc] sm:$0xf]
  %v1239 = vld [vmem:[%s17 + $0x10] sm:$0xf]
  %v1240 = vld [vmem:[%s17 + $0x14] sm:$0xf]
  %v1241 = vld [vmem:[%s17 + $0x18] sm:$0xf]
  %v1242 = vld [vmem:[%s17 + $0x1c] sm:$0xf]
  %v1243 = vld [vmem:[%s17 + $0x20] sm:$0xf]
  %v1244 = vld [vmem:[%s17 + $0x24] sm:$0xf]
  %v1245 = vld [vmem:[%s17 + $0x28] sm:$0xf]
  %v1246 = vld [vmem:[%s17 + $0x2c] sm:$0xf]
  %v1247 = vld [vmem:[%s17 + $0x30] sm:$0xf]
  %v1248 = vld [vmem:[%s17 + $0x34] sm:$0xf]
  %v1249 = vld [vmem:[%s17 + $0x38] sm:$0xf]
  %v1250 = vld [vmem:[%s17 + $0x3c] sm:$0xf]
  %v1251 = vld [vmem:[%s18] sm:$0x1]
  %v1252 = vpack.c.bf16 %v1234, %v1233
  %v1254 = vlaneseq
  %v1255 = vshrl.u32 %v1254, 7
  %v1256 = vsub.s32 0, %v1255
  %v1257 = vrot.slane %v1251, %v1256
  %v1275 = vunpack.c.l.b16 %v1235
  %v1276 = vunpack.c.l.b16 %v1236
  %v1277 = vunpack.c.l.b16 %v1237
  %v1278 = vunpack.c.l.b16 %v1238
  %v1279 = vunpack.c.l.b16 %v1239
  %v1280 = vunpack.c.l.b16 %v1240
  %v1281 = vunpack.c.l.b16 %v1241
  %v1282 = vunpack.c.l.b16 %v1242
  %v1283 = vunpack.c.l.b16 %v1243
  %v1284 = vunpack.c.l.b16 %v1244
  %v1285 = vunpack.c.l.b16 %v1245
  %v1286 = vunpack.c.l.b16 %v1246
  %v1287 = vunpack.c.l.b16 %v1247
  %v1288 = vunpack.c.l.b16 %v1248
  %v1289 = vunpack.c.l.b16 %v1249
  %v1290 = vunpack.c.l.b16 %v1250
  %v1291 = vpack.c.b16 %v1276, %v1275
  %v1292 = vpack.c.b16 %v1278, %v1277
  %v1293 = vpack.c.b16 %v1280, %v1279
  %v1294 = vpack.c.b16 %v1282, %v1281
  %v1295 = vpack.c.b16 %v1284, %v1283
  %v1296 = vpack.c.b16 %v1286, %v1285
  %v1297 = vpack.c.b16 %v1288, %v1287
  %v1298 = vpack.c.b16 %v1290, %v1289
  %1307 = vmatprep.subr.bf16.mxu0 0
  %1308 = vmatpush1.bf16.msra.mxu0 %v1298
  %1309 = vmatprep.subr.bf16.mxu0 0
  %1310 = vmatpush1.bf16.msra.mxu0 %v1297
  %1311 = vmatprep.subr.bf16.mxu0 0
  %1312 = vmatpush1.bf16.msra.mxu0 %v1296
  %1313 = vmatprep.subr.bf16.mxu0 0
  %1314 = vmatpush1.bf16.msra.mxu0 %v1295
  %1315 = vmatprep.subr.bf16.mxu0 0
  %1316 = vmatpush1.bf16.msra.mxu0 %v1294
  %1317 = vmatprep.subr.bf16.mxu0 0
  %1318 = vmatpush1.bf16.msra.mxu0 %v1293
  %1319 = vmatprep.subr.bf16.mxu0 0
  %1320 = vmatpush1.bf16.msra.mxu0 %v1292
  %1321 = vmatprep.subr.bf16.mxu0 0
  %1322 = vmatpush1.bf16.msra.mxu0 %v1291
  %1323 = vmatprep.subr.bf16.mxu0 0
  %1324 = vmatpush2.bf16.msra.mxu0 0
  %1325 = vmatprep.subr.bf16.mxu0 0
  %1326 = vmatpush2.bf16.msra.mxu0 0
  %1327 = vmatprep.subr.bf16.mxu0 0
  %1328 = vmatpush2.bf16.msra.mxu0 0
  %1329 = vmatprep.subr.bf16.mxu0 0
  %1330 = vmatpush2.bf16.msra.mxu0 0
  %1331 = vmatprep.subr.bf16.mxu0 0
  %1332 = vmatpush2.bf16.msra.mxu0 0
  %1333 = vmatprep.subr.bf16.mxu0 0
  %1334 = vmatpush2.bf16.msra.mxu0 0
  %1335 = vmatprep.subr.bf16.mxu0 0
  %1336 = vmatpush2.bf16.msra.mxu0 0
  %1337 = vmatprep.subr.bf16.mxu0 0
  %1338 = vmatpush2.bf16.msra.mxu0 0
  %1339 = vmatprep.mubr.bf16.mxu0 0
  %1340 = vmatmul.mubr.bf16.gmra.mxu0 %v1252
  %v1341 = vpop.f32.mrf.mxu0
  %v1342 = vadd.f32 %v1257, %v1341
  %v1343 = vpop.f32.mrf.mxu0
  %v1344 = vpop.f32.mrf.mxu0
  %v1345 = vadd.f32 %v1257, %v1344
  %v1346 = vpop.f32.mrf.mxu0
  %1347 = vdwg.mxu0
  %v1348 = vmax.f32 %v1342, 0.0
  %v1349 = vmax.f32 %v1345, 0.0
  %v1350 = vld [vmem:[%s19] sm:$0xf]
  %v1351 = vld [vmem:[%s19 + $0x4] sm:$0xf]
  %v1352 = vld [vmem:[%s19 + $0x8] sm:$0xf]
  %v1353 = vld [vmem:[%s19 + $0xc] sm:$0xf]
  %v1354 = vld [vmem:[%s19 + $0x10] sm:$0xf]
  %v1355 = vld [vmem:[%s19 + $0x14] sm:$0xf]
  %v1356 = vld [vmem:[%s19 + $0x18] sm:$0xf]
  %v1357 = vld [vmem:[%s19 + $0x1c] sm:$0xf]
  %v1358 = vld [vmem:[%s19 + $0x20] sm:$0xf]
  %v1359 = vld [vmem:[%s19 + $0x24] sm:$0xf]
  %v1360 = vld [vmem:[%s19 + $0x28] sm:$0xf]
  %v1361 = vld [vmem:[%s19 + $0x2c] sm:$0xf]
  %v1362 = vld [vmem:[%s19 + $0x30] sm:$0xf]
  %v1363 = vld [vmem:[%s19 + $0x34] sm:$0xf]
  %v1364 = vld [vmem:[%s19 + $0x38] sm:$0xf]
  %v1365 = vld [vmem:[%s19 + $0x3c] sm:$0xf]
  %v1366 = vld [vmem:[%s20] sm:$0x1]
  %v1367 = vpack.c.bf16 %v1349, %v1348
  %v1369 = vlaneseq
  %v1370 = vshrl.u32 %v1369, 7
  %v1371 = vsub.s32 0, %v1370
  %v1372 = vrot.slane %v1366, %v1371
  %v1390 = vunpack.c.l.b16 %v1350
  %v1391 = vunpack.c.l.b16 %v1351
  %v1392 = vunpack.c.l.b16 %v1352
  %v1393 = vunpack.c.l.b16 %v1353
  %v1394 = vunpack.c.l.b16 %v1354
  %v1395 = vunpack.c.l.b16 %v1355
  %v1396 = vunpack.c.l.b16 %v1356
  %v1397 = vunpack.c.l.b16 %v1357
  %v1398 = vunpack.c.l.b16 %v1358
  %v1399 = vunpack.c.l.b16 %v1359
  %v1400 = vunpack.c.l.b16 %v1360
  %v1401 = vunpack.c.l.b16 %v1361
  %v1402 = vunpack.c.l.b16 %v1362
  %v1403 = vunpack.c.l.b16 %v1363
  %v1404 = vunpack.c.l.b16 %v1364
  %v1405 = vunpack.c.l.b16 %v1365
  %v1406 = vpack.c.b16 %v1391, %v1390
  %v1407 = vpack.c.b16 %v1393, %v1392
  %v1408 = vpack.c.b16 %v1395, %v1394
  %v1409 = vpack.c.b16 %v1397, %v1396
  %v1410 = vpack.c.b16 %v1399, %v1398
  %v1411 = vpack.c.b16 %v1401, %v1400
  %v1412 = vpack.c.b16 %v1403, %v1402
  %v1413 = vpack.c.b16 %v1405, %v1404
  %1422 = vmatprep.subr.bf16.mxu0 0
  %1423 = vmatpush1.bf16.msra.mxu0 %v1413
  %1424 = vmatprep.subr.bf16.mxu0 0
  %1425 = vmatpush1.bf16.msra.mxu0 %v1412
  %1426 = vmatprep.subr.bf16.mxu0 0
  %1427 = vmatpush1.bf16.msra.mxu0 %v1411
  %1428 = vmatprep.subr.bf16.mxu0 0
  %1429 = vmatpush1.bf16.msra.mxu0 %v1410
  %1430 = vmatprep.subr.bf16.mxu0 0
  %1431 = vmatpush1.bf16.msra.mxu0 %v1409
  %1432 = vmatprep.subr.bf16.mxu0 0
  %1433 = vmatpush1.bf16.msra.mxu0 %v1408
  %1434 = vmatprep.subr.bf16.mxu0 0
  %1435 = vmatpush1.bf16.msra.mxu0 %v1407
  %1436 = vmatprep.subr.bf16.mxu0 0
  %1437 = vmatpush1.bf16.msra.mxu0 %v1406
  %1438 = vmatprep.subr.bf16.mxu0 0
  %1439 = vmatpush2.bf16.msra.mxu0 0
  %1440 = vmatprep.subr.bf16.mxu0 0
  %1441 = vmatpush2.bf16.msra.mxu0 0
  %1442 = vmatprep.subr.bf16.mxu0 0
  %1443 = vmatpush2.bf16.msra.mxu0 0
  %1444 = vmatprep.subr.bf16.mxu0 0
  %1445 = vmatpush2.bf16.msra.mxu0 0
  %1446 = vmatprep.subr.bf16.mxu0 0
  %1447 = vmatpush2.bf16.msra.mxu0 0
  %1448 = vmatprep.subr.bf16.mxu0 0
  %1449 = vmatpush2.bf16.msra.mxu0 0
  %1450 = vmatprep.subr.bf16.mxu0 0
  %1451 = vmatpush2.bf16.msra.mxu0 0
  %1452 = vmatprep.subr.bf16.mxu0 0
  %1453 = vmatpush2.bf16.msra.mxu0 0
  %1454 = vmatprep.mubr.bf16.mxu0 0
  %1455 = vmatmul.mubr.bf16.gmra.mxu0 %v1367
  %v1456 = vpop.f32.mrf.mxu0
  %v1457 = vadd.f32 %v1372, %v1456
  %v1458 = vpop.f32.mrf.mxu0
  %v1459 = vpop.f32.mrf.mxu0
  %v1460 = vadd.f32 %v1372, %v1459
  %v1461 = vpop.f32.mrf.mxu0
  %1462 = vdwg.mxu0
  %1463 = vst [vmem:[%s21] sm:$0xff] %v1457
  %1464 = vst [vmem:[%s21 + $0x8] sm:$0xff] %v1460
  // Predicated region
  $region86: #{simple_dnn_forward.1} parent=0 // pred_check
    _
  $region87: #{simple_dnn_forward.1} parent=0 // pred_check_branch
    %1466 = sbr.rel (0) target = $region89
  $region88: #{simple_dnn_forward.1} parent=0 // pred_region
    _
  $region89: #{simple_dnn_forward.1} parent=0 // pred_fallthru
    _
  // Predicated region
  $region90: #{simple_dnn_forward.1} parent=0 // pred_check
    _
  $region91: #{simple_dnn_forward.1} parent=0 // pred_check_branch
    %1468 = sbr.rel (0) target = $region93
  $region92: #{simple_dnn_forward.1} parent=0 // pred_region
    _
  $region93: #{simple_dnn_forward.1} parent=0 // pred_fallthru
    _

</llo_original>
